<compile_context>
chip_gen: v5e
topology: v5e:2x2
jax: 0.10.0
libtpu: 0.0.40
codegen_flags: <defaults>
</compile_context>

<pallas_src>
import functools

import jax
import jax.numpy as jnp
from jax import lax
from jax.experimental import pallas as pl
from jax.experimental.pallas import tpu as pltpu


def _conv_instnorm_kernel(x_ref, w_ref, b_ref, o_ref, *, c_in, c_out, kh, kw,
                          h_out, w_out, eps):
    # x_ref: (c_in, H, W)           this sample's image (batch dim squeezed)
    # w_ref: (c_out, kh*kw*c_in)    conv weight, pre-flattened (resident across grid)
    # b_ref: (c_out, 1)             conv bias, f32       (resident across grid)
    # o_ref: (c_out, h_out*w_out)   normalized conv output, lane-flattened
    hw = h_out * w_out

    # im2col in VMEM: stack the KH*KW shifted windows along K so the whole conv
    # is a single MXU matmul (K = kh*kw*c_in, N = h_out*w_out) instead of
    # kh*kw tiny K=c_in matmuls.
    pieces = []
    for i in range(kh):
        for j in range(kw):
            win = x_ref[:, i:i + h_out, j:j + w_out]          # (c_in, h_out, w_out)
            pieces.append(win.reshape(c_in, hw))
    patches = jnp.concatenate(pieces, axis=0)                 # (kh*kw*c_in, hw)

    # Conv: one MXU matmul, f32 accumulation, inputs kept in their native dtype.
    acc = jnp.dot(w_ref[...], patches,
                  preferred_element_type=jnp.float32)         # (c_out, hw) f32
    acc = acc + b_ref[...]                                    # bias broadcast

    # InstanceNorm2d (affine=False, biased variance) over the spatial lane axis.
    inv_hw = 1.0 / float(hw)
    mean = jnp.sum(acc, axis=1, keepdims=True) * inv_hw
    cen = acc - mean
    var = jnp.sum(cen * cen, axis=1, keepdims=True) * inv_hw
    y = cen * lax.rsqrt(var + eps)

    # Single full-width (whole last dim) store — no masked sub-lane row slices.
    o_ref[...] = y.astype(o_ref.dtype)


def layer_norm_conv2d(x, weight, bias, *, stride=1, padding=0, eps=1e-5):
    """x: (N, C_in, H, W), weight: (C_out, C_in, KH, KW), bias: (C_out,)."""
    if stride != 1:
        # TODO(synk): stride > 1 would need strided window slicing in the kernel;
        # the module default (stride=1) is what is implemented here.
        raise NotImplementedError("only stride=1 is implemented")

    n, c_in, h, w = x.shape
    c_out, c_in_w, kh, kw = weight.shape
    assert c_in_w == c_in, "weight/in_channels mismatch"

    if padding:
        x = jnp.pad(x, ((0, 0), (0, 0), (padding, padding), (padding, padding)))
        h += 2 * padding
        w += 2 * padding

    h_out = h - kh + 1
    w_out = w - kw + 1
    hw = h_out * w_out
    kflat = kh * kw * c_in

    # Flatten the weight so its K order matches the in-kernel im2col stacking:
    # K index = (i*kw + j)*c_in + ci.
    w2 = jnp.transpose(weight, (0, 2, 3, 1)).reshape(c_out, kflat).astype(x.dtype)
    b2 = bias.reshape(c_out, 1).astype(jnp.float32)

    kernel = functools.partial(
        _conv_instnorm_kernel, c_in=c_in, c_out=c_out, kh=kh, kw=kw,
        h_out=h_out, w_out=w_out, eps=float(eps))

    out_flat = pl.pallas_call(
        kernel,
        out_shape=jax.ShapeDtypeStruct((n, c_out, hw), x.dtype),
        grid=(n,),
        in_specs=[
            pl.BlockSpec((None, c_in, h, w), lambda i: (i, 0, 0, 0)),   # per-sample image
            pl.BlockSpec((c_out, kflat), lambda i: (0, 0)),             # weight (resident)
            pl.BlockSpec((c_out, 1), lambda i: (0, 0)),                 # bias   (resident)
        ],
        out_specs=pl.BlockSpec((None, c_out, hw), lambda i: (i, 0, 0)),
        compiler_params=pltpu.CompilerParams(dimension_semantics=("parallel",)),
    )(x, w2, b2)

    # Free row-major reshape to the module's NCHW output layout.
    return out_flat.reshape(n, c_out, h_out, w_out)


def layer_norm_conv2d_ref(x, weight, bias, *, stride=1, padding=0, eps=1e-5):
    # Pure-JAX mirror of the PyTorch forward: Conv2d -> InstanceNorm2d.
    y = lax.conv_general_dilated(
        x, weight,
        window_strides=(stride, stride),
        padding=[(padding, padding), (padding, padding)],
        dimension_numbers=("NCHW", "OIHW", "NCHW"))
    y = y + bias[None, :, None, None]
    mean = jnp.mean(y, axis=(2, 3), keepdims=True)
    var = jnp.mean((y - mean) ** 2, axis=(2, 3), keepdims=True)
    return (y - mean) * lax.rsqrt(var + eps)


if __name__ == "__main__":
    key = jax.random.PRNGKey(0)
    k1, k2, k3 = jax.random.split(key, 3)
    n, c_in, c_out, h, w, ks = 2, 4, 8, 16, 16, 3

    # Small integer-valued f32 data: exactly representable at any MXU pass
    # precision, so the conv part of kernel and reference agree exactly and only
    # the norm's f32 rounding differs (covered by the tolerance).
    x = jax.random.randint(k1, (n, c_in, h, w), -4, 5).astype(jnp.float32)
    weight = jax.random.randint(k2, (c_out, c_in, ks, ks), -4, 5).astype(jnp.float32)
    bias = jax.random.randint(k3, (c_out,), -4, 5).astype(jnp.float32)

    out = layer_norm_conv2d(x, weight, bias)
    out = jax.block_until_ready(out)

    ref = layer_norm_conv2d_ref(x, weight, bias)
    assert out.shape == (n, c_out, h - ks + 1, w - ks + 1), out.shape
    assert out.dtype == x.dtype, out.dtype
    max_err = float(jnp.max(jnp.abs(out - ref)))
    assert max_err < 1e-4, f"LayerNormConv2d kernel mismatch vs reference: {max_err}"

    print("KERNEL_OK")
</pallas_src>

<mosaic_0001>
module attributes {stable_mosaic.version = 11 : i64} {
  func.func @_conv_instnorm_kernel(%arg0: i32, %arg1: memref<1x4x16x16xf32, #tpu.memory_space<vmem>>, %arg2: memref<8x36xf32, #tpu.memory_space<vmem>>, %arg3: memref<8x1xf32, #tpu.memory_space<vmem>>, %arg4: memref<1x8x196xf32, #tpu.memory_space<vmem>>) attributes {dimension_semantics = [#tpu.dimension_semantics<parallel>], iteration_bounds = array<i64: 2>, scalar_prefetch = 0 : i64, scratch_operands = 0 : i64, tpu.core_type = #tpu.core_type<tc>, window_params = [{transform_indices = @transform_0, window_bounds = array<i64: 1, 4, 16, 16>}, {pipeline_mode = #tpu.pipeline_mode<synchronous>, transform_indices = @transform_1, window_bounds = array<i64: 8, 36>}, {pipeline_mode = #tpu.pipeline_mode<synchronous>, transform_indices = @transform_2, window_bounds = array<i64: 8, 1>}, {transform_indices = @transform_3, window_bounds = array<i64: 1, 8, 196>}]} {
    %c0 = arith.constant 0 : index
    %c0_0 = arith.constant 0 : index
    %c0_1 = arith.constant 0 : index
    %c0_2 = arith.constant 0 : index
    %0 = vector.load %arg1[%c0, %c0_0, %c0_1, %c0_2] : memref<1x4x16x16xf32, #tpu.memory_space<vmem>>, vector<1x4x14x14xf32>
    %1 = vector.shape_cast %0 : vector<1x4x14x14xf32> to vector<4x14x14xf32>
    %2 = vector.shape_cast %1 : vector<4x14x14xf32> to vector<4x196xf32>
    %c0_3 = arith.constant 0 : index
    %c0_4 = arith.constant 0 : index
    %c0_5 = arith.constant 0 : index
    %c1 = arith.constant 1 : index
    %3 = vector.load %arg1[%c0_3, %c0_4, %c0_5, %c1] : memref<1x4x16x16xf32, #tpu.memory_space<vmem>>, vector<1x4x14x14xf32>
    %4 = vector.shape_cast %3 : vector<1x4x14x14xf32> to vector<4x14x14xf32>
    %5 = vector.shape_cast %4 : vector<4x14x14xf32> to vector<4x196xf32>
    %c0_6 = arith.constant 0 : index
    %c0_7 = arith.constant 0 : index
    %c0_8 = arith.constant 0 : index
    %c2 = arith.constant 2 : index
    %6 = vector.load %arg1[%c0_6, %c0_7, %c0_8, %c2] : memref<1x4x16x16xf32, #tpu.memory_space<vmem>>, vector<1x4x14x14xf32>
    %7 = vector.shape_cast %6 : vector<1x4x14x14xf32> to vector<4x14x14xf32>
    %8 = vector.shape_cast %7 : vector<4x14x14xf32> to vector<4x196xf32>
    %c0_9 = arith.constant 0 : index
    %c0_10 = arith.constant 0 : index
    %c1_11 = arith.constant 1 : index
    %c0_12 = arith.constant 0 : index
    %9 = vector.load %arg1[%c0_9, %c0_10, %c1_11, %c0_12] : memref<1x4x16x16xf32, #tpu.memory_space<vmem>>, vector<1x4x14x14xf32>
    %10 = vector.shape_cast %9 : vector<1x4x14x14xf32> to vector<4x14x14xf32>
    %11 = vector.shape_cast %10 : vector<4x14x14xf32> to vector<4x196xf32>
    %c0_13 = arith.constant 0 : index
    %c0_14 = arith.constant 0 : index
    %c1_15 = arith.constant 1 : index
    %c1_16 = arith.constant 1 : index
    %12 = vector.load %arg1[%c0_13, %c0_14, %c1_15, %c1_16] : memref<1x4x16x16xf32, #tpu.memory_space<vmem>>, vector<1x4x14x14xf32>
    %13 = vector.shape_cast %12 : vector<1x4x14x14xf32> to vector<4x14x14xf32>
    %14 = vector.shape_cast %13 : vector<4x14x14xf32> to vector<4x196xf32>
    %c0_17 = arith.constant 0 : index
    %c0_18 = arith.constant 0 : index
    %c1_19 = arith.constant 1 : index
    %c2_20 = arith.constant 2 : index
    %15 = vector.load %arg1[%c0_17, %c0_18, %c1_19, %c2_20] : memref<1x4x16x16xf32, #tpu.memory_space<vmem>>, vector<1x4x14x14xf32>
    %16 = vector.shape_cast %15 : vector<1x4x14x14xf32> to vector<4x14x14xf32>
    %17 = vector.shape_cast %16 : vector<4x14x14xf32> to vector<4x196xf32>
    %c0_21 = arith.constant 0 : index
    %c0_22 = arith.constant 0 : index
    %c2_23 = arith.constant 2 : index
    %c0_24 = arith.constant 0 : index
    %18 = vector.load %arg1[%c0_21, %c0_22, %c2_23, %c0_24] : memref<1x4x16x16xf32, #tpu.memory_space<vmem>>, vector<1x4x14x14xf32>
    %19 = vector.shape_cast %18 : vector<1x4x14x14xf32> to vector<4x14x14xf32>
    %20 = vector.shape_cast %19 : vector<4x14x14xf32> to vector<4x196xf32>
    %c0_25 = arith.constant 0 : index
    %c0_26 = arith.constant 0 : index
    %c2_27 = arith.constant 2 : index
    %c1_28 = arith.constant 1 : index
    %21 = vector.load %arg1[%c0_25, %c0_26, %c2_27, %c1_28] : memref<1x4x16x16xf32, #tpu.memory_space<vmem>>, vector<1x4x14x14xf32>
    %22 = vector.shape_cast %21 : vector<1x4x14x14xf32> to vector<4x14x14xf32>
    %23 = vector.shape_cast %22 : vector<4x14x14xf32> to vector<4x196xf32>
    %c0_29 = arith.constant 0 : index
    %c0_30 = arith.constant 0 : index
    %c2_31 = arith.constant 2 : index
    %c2_32 = arith.constant 2 : index
    %24 = vector.load %arg1[%c0_29, %c0_30, %c2_31, %c2_32] : memref<1x4x16x16xf32, #tpu.memory_space<vmem>>, vector<1x4x14x14xf32>
    %25 = vector.shape_cast %24 : vector<1x4x14x14xf32> to vector<4x14x14xf32>
    %26 = vector.shape_cast %25 : vector<4x14x14xf32> to vector<4x196xf32>
    %27 = tpu.concatenate %2, %5, %8, %11, %14, %17, %20, %23, %26 in 0 : vector<4x196xf32>, vector<4x196xf32>, vector<4x196xf32>, vector<4x196xf32>, vector<4x196xf32>, vector<4x196xf32>, vector<4x196xf32>, vector<4x196xf32>, vector<4x196xf32> -> vector<36x196xf32>
    %c0_33 = arith.constant 0 : index
    %c0_34 = arith.constant 0 : index
    %28 = vector.load %arg2[%c0_33, %c0_34] : memref<8x36xf32, #tpu.memory_space<vmem>>, vector<8x36xf32>
    %cst = arith.constant dense<0.000000e+00> : vector<8x196xf32>
    %29 = tpu.matmul %28, %27, %cst {dimension_numbers = #tpu.dot_dimension_numbers<[1], [0], [0], [1], [0, 0, 1, 1], [], []>} : vector<8x36xf32>, vector<36x196xf32>, vector<8x196xf32> -> vector<8x196xf32>
    %c0_35 = arith.constant 0 : index
    %c0_36 = arith.constant 0 : index
    %30 = vector.load %arg3[%c0_35, %c0_36] : memref<8x1xf32, #tpu.memory_space<vmem>>, vector<8x1xf32>
    %31 = vector.broadcast %30 : vector<8x1xf32> to vector<8x196xf32>
    %32 = arith.addf %29, %31 : vector<8x196xf32>
    %cst_37 = arith.constant dense<0.000000e+00> : vector<8xf32>
    %33 = vector.multi_reduction <add>, %32, %cst_37 [1] : vector<8x196xf32> to vector<8xf32>
    %34 = vector.shape_cast %33 : vector<8xf32> to vector<8x1xf32>
    %cst_38 = arith.constant 0.00510204071 : f32
    %35 = vector.broadcast %cst_38 : f32 to vector<8x1xf32>
    %36 = arith.mulf %34, %35 : vector<8x1xf32>
    %37 = vector.broadcast %36 : vector<8x1xf32> to vector<8x196xf32>
    %38 = arith.subf %32, %37 : vector<8x196xf32>
    %39 = arith.mulf %38, %38 : vector<8x196xf32>
    %cst_39 = arith.constant dense<0.000000e+00> : vector<8xf32>
    %40 = vector.multi_reduction <add>, %39, %cst_39 [1] : vector<8x196xf32> to vector<8xf32>
    %41 = vector.shape_cast %40 : vector<8xf32> to vector<8x1xf32>
    %cst_40 = arith.constant 0.00510204071 : f32
    %42 = vector.broadcast %cst_40 : f32 to vector<8x1xf32>
    %43 = arith.mulf %41, %42 : vector<8x1xf32>
    %cst_41 = arith.constant 9.99999974E-6 : f32
    %44 = vector.broadcast %cst_41 : f32 to vector<8x1xf32>
    %45 = arith.addf %43, %44 : vector<8x1xf32>
    %46 = math.rsqrt %45 : vector<8x1xf32>
    %47 = vector.broadcast %46 : vector<8x1xf32> to vector<8x196xf32>
    %48 = arith.mulf %38, %47 : vector<8x196xf32>
    %c0_42 = arith.constant 0 : index
    %c0_43 = arith.constant 0 : index
    %c0_44 = arith.constant 0 : index
    %49 = vector.load %arg4[%c0_42, %c0_43, %c0_44] : memref<1x8x196xf32, #tpu.memory_space<vmem>>, vector<1x8x196xf32>
    %50 = vector.shape_cast %49 : vector<1x8x196xf32> to vector<8x196xf32>
    %51 = vector.shape_cast %48 : vector<8x196xf32> to vector<1x8x196xf32>
    tpu.vector_store %arg4[%c0_42, %c0_43, %c0_44], %51 {strides = array<i32>} : memref<1x8x196xf32, #tpu.memory_space<vmem>>, vector<1x8x196xf32>,
    return
  }
  func.func @transform_0(%arg0: i32) -> (i32, i32, i32, i32) {
    %c0_i32 = arith.constant 0 : i32
    %c0_i32_0 = arith.constant 0 : i32
    %c0_i32_1 = arith.constant 0 : i32
    %c0_i32_2 = arith.constant 0 : i32
    return %arg0, %c0_i32, %c0_i32_0, %c0_i32_1 : i32, i32, i32, i32
  }
  func.func @transform_1(%arg0: i32) -> (i32, i32) {
    %c0_i32 = arith.constant 0 : i32
    %c0_i32_0 = arith.constant 0 : i32
    %c0_i32_1 = arith.constant 0 : i32
    return %c0_i32, %c0_i32_0 : i32, i32
  }
  func.func @transform_2(%arg0: i32) -> (i32, i32) {
    %c0_i32 = arith.constant 0 : i32
    %c0_i32_0 = arith.constant 0 : i32
    %c0_i32_1 = arith.constant 0 : i32
    return %c0_i32, %c0_i32_0 : i32, i32
  }
  func.func @transform_3(%arg0: i32) -> (i32, i32, i32) {
    %c0_i32 = arith.constant 0 : i32
    %c0_i32_0 = arith.constant 0 : i32
    %c0_i32_1 = arith.constant 0 : i32
    return %arg0, %c0_i32, %c0_i32_0 : i32, i32, i32
  }
}

</mosaic_0001>

<llo_original>
// kernel: tpu_custom_call.1
$region0: #{tpu_custom_call.1}
  #allocation0 [shape = 'u32[]', space=smem, size = 0x4, offset = 0x4, fixed_abs, tag = 'smem constant byte address 0x4 - core index']
  #allocation1 [shape = 'u32[72,128]{1,0:T(1,128)}', space=vmem, size = 0x9000, scoped, tag = 'internal scratch']
  %s0 = inlined_call_operand.hbm [shape: f32[2,4,16,16], index: 0, kind: input, shape index: {}]
  %s1 = inlined_call_operand.vmem [shape: f32[8,36], index: 1, kind: input, shape index: {}]
  %s2 = inlined_call_operand.vmem [shape: f32[8,1], index: 2, kind: input, shape index: {}]
  %s3 = inlined_call_operand.hbm [shape: f32[2,8,196], index: 3, kind: output, shape index: {}]
  %s4 = sld [smem:[#allocation0]]
  $region49: #{tpu_custom_call.1} parent=0
    _
  %s6 = ssub.s32 1, %s4
  %s7 = scalar_select 0, %s6, %s4
  $region1: #{tpu_custom_call.1} parent=0
    #allocation2 [shape = 'u8[65536]{0}', space=vmem, size = 0x10000, scoped, tag = 'input window, operand 0']
    #allocation3 [shape = 's32[2]{0}', space=sflag, size = 0x8, scoped, tag = 'scoped memory for tpu_custom_call.1']
    #allocation4 [shape = 's32[2]{0}', space=sflag, size = 0x8, scoped, tag = 'scoped memory for tpu_custom_call.1']
    #allocation5 [shape = 'u8[16384]{0}', space=vmem, size = 0x4000, scoped, tag = 'output window, operand 0']
    %8 = vsyncpa [#allocation3], 0
    %s9 = scalar_lea.sflag [#allocation3], 1
    %10 = vsyncpa %s9, 0
    %11 = vsyncpa [#allocation4], 0
    %s12 = scalar_lea.sflag [#allocation4], 1
    %13 = vsyncpa %s12, 0
    loop: start=0, step=1, limit=4
    $region2: #{tpu_custom_call.1} parent=1 // loop_pre_header
      _
    $region3: #{tpu_custom_call.1} parent=1 // loop_header
      %s15 = sphi 0, %s19
      %p16 = scmp.ge.s32.totalorder %s15, 4
      %s25 = sphi 0, %s27
      %s28 = sphi 0, %s25
      %s29 = sphi 0, %s28
      %s45 = sphi 0, %s29
      %s49 = sphi 0, %s49
      %s51 = sphi 0, %s49
      %s52 = sphi 0, %s51
      %s66 = sphi 0, %s52
      %s70 = sphi 0, %s70
      %s72 = sphi 0, %s70
      %s73 = sphi 0, %s72
      %s87 = sphi 0, %s73
      %s93 = sphi 0, %s95
      %s96 = sphi 0, %s93
      %s97 = sphi 0, %s96
      %s113 = sphi 0, %s97
    $region4: #{tpu_custom_call.1} parent=1 // loop_header_branch
      %18 = sbr.rel (%p16) target = $region8
    $region5: #{tpu_custom_call.1} parent=1 // loop_body
      %s20 = ssub.s32 %s15, 1
      %s21 = ssub.s32 %s15, 2
      %s22 = sadd.s32 %s15, 1
      %s23 = ssub.s32 %s15, %s22
      %p24 = scmp.eq.s32.totalorder %s23, 0
      %s26 = sadd.s32 %s25, 1
      %s27 = scalar_select %p24, %s25, %s26
      %p30 = pneg %p24
      %p31 = scmp.eq.s32.totalorder %s15, 1
      %p32 = por %p30, %p31
      %p33 = scmp.ne.s32.totalorder %s25, %s28
      %p34 = scmp.eq.s32.totalorder %s15, 0
      %p35 = por %p33, %p34
      %p36 = scmp.ne.s32.totalorder %s25, %s28
      %p37 = scmp.eq.s32.totalorder %s20, 1
      %p38 = por %p36, %p37
      %p39 = scmp.ne.s32.totalorder %s28, %s29
      %p40 = scmp.eq.s32.totalorder %s20, 0
      %p41 = por %p39, %p40
      %p42 = scmp.ne.s32.totalorder %s28, %s29
      %p43 = scmp.eq.s32.totalorder %s21, 1
      %p44 = por %p42, %p43
      %p46 = scmp.ne.s32.totalorder %s29, %s45
      %p47 = scmp.eq.s32.totalorder %s21, 0
      %p48 = por %p46, %p47
      %s50 = sadd.s32 %s49, 1
      %p53 = scmp.eq.s32.totalorder %s15, 1
      %p54 = scmp.ne.s32.totalorder %s49, %s51
      %p55 = scmp.eq.s32.totalorder %s15, 0
      %p56 = por %p54, %p55
      %p57 = scmp.ne.s32.totalorder %s49, %s51
      %p58 = scmp.eq.s32.totalorder %s20, 1
      %p59 = por %p57, %p58
      %p60 = scmp.ne.s32.totalorder %s51, %s52
      %p61 = scmp.eq.s32.totalorder %s20, 0
      %p62 = por %p60, %p61
      %p63 = scmp.ne.s32.totalorder %s51, %s52
      %p64 = scmp.eq.s32.totalorder %s21, 1
      %p65 = por %p63, %p64
      %p67 = scmp.ne.s32.totalorder %s52, %s66
      %p68 = scmp.eq.s32.totalorder %s21, 0
      %p69 = por %p67, %p68
      %s71 = sadd.s32 %s70, 1
      %p74 = scmp.eq.s32.totalorder %s15, 1
      %p75 = scmp.ne.s32.totalorder %s70, %s72
      %p76 = scmp.eq.s32.totalorder %s15, 0
      %p77 = por %p75, %p76
      %p78 = scmp.ne.s32.totalorder %s70, %s72
      %p79 = scmp.eq.s32.totalorder %s20, 1
      %p80 = por %p78, %p79
      %p81 = scmp.ne.s32.totalorder %s72, %s73
      %p82 = scmp.eq.s32.totalorder %s20, 0
      %p83 = por %p81, %p82
      %p84 = scmp.ne.s32.totalorder %s72, %s73
      %p85 = scmp.eq.s32.totalorder %s21, 1
      %p86 = por %p84, %p85
      %p88 = scmp.ne.s32.totalorder %s73, %s87
      %p89 = scmp.eq.s32.totalorder %s21, 0
      %p90 = por %p88, %p89
      %s91 = ssub.s32 %s15, %s22
      %p92 = scmp.eq.s32.totalorder %s91, 0
      %s94 = sadd.s32 %s93, 1
      %s95 = scalar_select %p92, %s93, %s94
      %p98 = pneg %p92
      %p99 = scmp.eq.s32.totalorder %s15, 1
      %p100 = por %p98, %p99
      %p101 = scmp.ne.s32.totalorder %s93, %s96
      %p102 = scmp.eq.s32.totalorder %s15, 0
      %p103 = por %p101, %p102
      %p104 = scmp.ne.s32.totalorder %s93, %s96
      %p105 = scmp.eq.s32.totalorder %s20, 1
      %p106 = por %p104, %p105
      %p107 = scmp.ne.s32.totalorder %s96, %s97
      %p108 = scmp.eq.s32.totalorder %s20, 0
      %p109 = por %p107, %p108
      %p110 = scmp.ne.s32.totalorder %s96, %s97
      %p111 = scmp.eq.s32.totalorder %s21, 1
      %p112 = por %p110, %p111
      %p114 = scmp.ne.s32.totalorder %s97, %s113
      %p115 = scmp.eq.s32.totalorder %s21, 0
      %p116 = por %p114, %p115
      %p117 = scmp.le.s32.totalorder 1, %s15
      %p118 = scmp.lt.s32.totalorder %s15, 3
      %p119 = pnand %p117, %p118
      %p120 = pneg %p119
      // Predicated region
      $region9: #{tpu_custom_call.1} parent=5 // pred_check
        _
      $region10: #{tpu_custom_call.1} parent=5 // pred_check_branch
        %122 = sbr.rel (%p119) target = $region12
      $region11: #{tpu_custom_call.1} parent=5 // pred_region
        %s123 = ssub.s32 %s15, 1
        // Predicated region
        $region13: #{tpu_custom_call.1} parent=11 // pred_check
          %p124 = pneg %p62
        $region14: #{tpu_custom_call.1} parent=11 // pred_check_branch
          %126 = sbr.rel (%p124) target = $region16
        $region15: #{tpu_custom_call.1} parent=11 // pred_region
          _
        $region16: #{tpu_custom_call.1} parent=11 // pred_fallthru
          _
        // Predicated region
        $region17: #{tpu_custom_call.1} parent=11 // pred_check
          %p127 = pneg %p83
        $region18: #{tpu_custom_call.1} parent=11 // pred_check_branch
          %129 = sbr.rel (%p127) target = $region20
        $region19: #{tpu_custom_call.1} parent=11 // pred_region
          _
        $region20: #{tpu_custom_call.1} parent=11 // pred_fallthru
          _
      $region12: #{tpu_custom_call.1} parent=5 // pred_fallthru
        _
      %p130 = scmp.lt.s32.totalorder %s15, 2
      // Predicated region
      $region21: #{tpu_custom_call.1} parent=5 // pred_check
        %p131 = pneg %p130
      $region22: #{tpu_custom_call.1} parent=5 // pred_check_branch
        %133 = sbr.rel (%p131) target = $region24
      $region23: #{tpu_custom_call.1} parent=5 // pred_region
        // Predicated region
        $region25: #{tpu_custom_call.1} parent=23 // pred_check
          %p134 = pneg %p35
        $region26: #{tpu_custom_call.1} parent=23 // pred_check_branch
          %136 = sbr.rel (%p134) target = $region28
        $region27: #{tpu_custom_call.1} parent=23 // pred_region
          %s137 = sand.u32 %s25, 1
          %s138 = scalar_lea.sflag [#allocation3], %s137
          %s139 = sand.u32 %s25, 1
          %s140 = smul.addr %s139, 64
          %s141 = scalar_lea.vmem [#allocation2], %s140
          %143 = vsyncadd %s138, 0
          %s144 = smul.addr %s15, 8
          %s145 = smul.addr %s144, 8
          %s146 = scalar_lea.hbm %s0, %s145
          %s147 = sshll.u32 %s146, 4
          %s148 = int_to_ptr.hbm [resolvable:$true] %s147
          %s149 = sshll.u32 %s141, 4
          %s150 = int_to_ptr.vmem [resolvable:$true] %s149
          %155 = dma.hbm_to_vmem [thread:$0]  %s148, 1024, %s150, %s138, 128, 128, 8
        $region28: #{tpu_custom_call.1} parent=23 // pred_fallthru
          _
      $region24: #{tpu_custom_call.1} parent=5 // pred_fallthru
        _
      %p156 = scmp.le.s32.totalorder 1, %s15
      %p157 = scmp.lt.s32.totalorder %s15, 3
      %p158 = pnand %p156, %p157
      %p159 = pneg %p158
      // Predicated region
      $region29: #{tpu_custom_call.1} parent=5 // pred_check
        _
      $region30: #{tpu_custom_call.1} parent=5 // pred_check_branch
        %161 = sbr.rel (%p158) target = $region32
      $region31: #{tpu_custom_call.1} parent=5 // pred_region
        %s162 = ssub.s32 %s15, 1
        %s163 = sand.u32 %s28, 1
        %s164 = scalar_lea.sflag [#allocation3], %s163
        %s165 = sand.u32 %s28, 1
        %s166 = smul.addr %s165, 64
        %s167 = scalar_lea.vmem [#allocation2], %s166
        // Predicated region
        $region33: #{tpu_custom_call.1} parent=31 // pred_check
          %p168 = pneg %p41
        $region34: #{tpu_custom_call.1} parent=31 // pred_check_branch
          %170 = sbr.rel (%p168) target = $region36
        $region35: #{tpu_custom_call.1} parent=31 // pred_region
          %172 = dma.done %s164, 1024
        $region36: #{tpu_custom_call.1} parent=31 // pred_fallthru
          _
        %s173 = sand.u32 %s28, 1
        %s174 = scalar_lea.sflag [#allocation3], %s173
        %s175 = sand.u32 %s28, 1
        %s176 = smul.addr %s175, 64
        %s177 = scalar_lea.vmem [#allocation2], %s176
        %p178 = pneg %p41
        %p179 = pneg %p38
        %p180 = pneg %p62
        %p181 = pneg %p59
        %p182 = pneg %p83
        %p183 = pneg %p80
        %p184 = pneg %p109
        %p185 = pneg %p106
        %s186 = sand.u32 %s96, 1
        %s187 = scalar_lea.sflag [#allocation4], %s186
        %s188 = sand.u32 %s96, 1
        %s189 = smul.addr %s188, 16
        %s190 = scalar_lea.vmem [#allocation5], %s189
        %v191 = vld [vmem:[%s167] sm:$0xff]
        %v192 = vld [vmem:[%s167 + $0x8] sm:$0x3f]
        %v193 = vld [vmem:[%s167 + $0x10] sm:$0xff]
        %v194 = vld [vmem:[%s167 + $0x18] sm:$0x3f]
        %v195 = vld [vmem:[%s167 + $0x20] sm:$0xff]
        %v196 = vld [vmem:[%s167 + $0x28] sm:$0x3f]
        %v197 = vld [vmem:[%s167 + $0x30] sm:$0xff]
        %v198 = vld [vmem:[%s167 + $0x38] sm:$0x3f]
        %v199 = vrot.slane %v195, 4
        %vm200 = vcmask 1047556
        %v201 = vsel %vm200, %v199, %v191
        %v202 = vrot.slane %v191, 4
        %v203 = vsel %vm200, %v195, %v202
        %v205 = vunpack.c.l.s4 1983009808
        %v206 = vunpack.c.0.s8 %v205
        %v207 = vperm.slane %v201, %v206
        %v209 = vunpack.c.l.s4 1983009808
        %v210 = vunpack.c.0.s8 %v209
        %v211 = vperm.slane %v203, %v210
        %v212 = vrot.slane %v197, 4
        %v213 = vsel %vm200, %v212, %v193
        %v214 = vrot.slane %v193, 4
        %v215 = vsel %vm200, %v197, %v214
        %v217 = vunpack.c.l.s4 1983009808
        %v218 = vunpack.c.0.s8 %v217
        %v219 = vperm.slane %v213, %v218
        %v221 = vunpack.c.l.s4 1983009808
        %v222 = vunpack.c.0.s8 %v221
        %v223 = vperm.slane %v215, %v222
        %v224 = vrot.slane %v219, 4
        %v225 = vsel %vm200, %v224, %v207
        %v226 = vrot.slane %v207, 4
        %v227 = vsel %vm200, %v219, %v226
        %v229 = vunpack.c.l.s4 1934713408
        %v230 = vunpack.c.0.s8 %v229
        %v231 = vperm.slane %v225, %v230
        %v233 = vunpack.c.l.s4 1934713408
        %v234 = vunpack.c.0.s8 %v233
        %v235 = vperm.slane %v227, %v234
        %v236 = vrot.slane %v223, 4
        %v237 = vsel %vm200, %v236, %v211
        %v238 = vrot.slane %v211, 4
        %v239 = vsel %vm200, %v223, %v238
        %v241 = vunpack.c.l.s4 1934713408
        %v242 = vunpack.c.0.s8 %v241
        %v243 = vperm.slane %v237, %v242
        %v245 = vunpack.c.l.s4 1934713408
        %v246 = vunpack.c.0.s8 %v245
        %v247 = vperm.slane %v239, %v246
        %v248 = vrot.slane %v231, 4
        %v249 = vsel %vm200, 0.0, %v248
        %v250 = vrot.slane %v235, 4
        %v251 = vsel %vm200, 0.0, %v250
        %v252 = vrot.slane %v243, 4
        %v253 = vsel %vm200, 0.0, %v252
        %v254 = vrot.slane %v247, 4
        %v255 = vsel %vm200, 0.0, %v254
        %v256 = vrot.slane %v196, 4
        %v257 = vsel %vm200, %v256, %v192
        %v258 = vrot.slane %v192, 4
        %v259 = vsel %vm200, %v196, %v258
        %v261 = vunpack.c.l.s4 1983009808
        %v262 = vunpack.c.0.s8 %v261
        %v263 = vperm.slane %v257, %v262
        %v265 = vunpack.c.l.s4 1983009808
        %v266 = vunpack.c.0.s8 %v265
        %v267 = vperm.slane %v259, %v266
        %v268 = vrot.slane %v198, 4
        %v269 = vsel %vm200, %v268, %v194
        %v270 = vrot.slane %v194, 4
        %v271 = vsel %vm200, %v198, %v270
        %v273 = vunpack.c.l.s4 1983009808
        %v274 = vunpack.c.0.s8 %v273
        %v275 = vperm.slane %v269, %v274
        %v277 = vunpack.c.l.s4 1983009808
        %v278 = vunpack.c.0.s8 %v277
        %v279 = vperm.slane %v271, %v278
        %v280 = vrot.slane %v275, 4
        %v281 = vsel %vm200, %v280, %v263
        %v282 = vrot.slane %v263, 4
        %v283 = vsel %vm200, %v275, %v282
        %v285 = vunpack.c.l.s4 1934713408
        %v286 = vunpack.c.0.s8 %v285
        %v287 = vperm.slane %v281, %v286
        %v289 = vunpack.c.l.s4 1934713408
        %v290 = vunpack.c.0.s8 %v289
        %v291 = vperm.slane %v283, %v290
        %v292 = vrot.slane %v279, 4
        %v293 = vsel %vm200, %v292, %v267
        %v295 = vunpack.c.l.s4 1934713408
        %v296 = vunpack.c.0.s8 %v295
        %v297 = vperm.slane %v293, %v296
        %v298 = vrot.slane %v287, 4
        %v299 = vsel %vm200, 0.0, %v298
        %v300 = vrot.slane %v291, 4
        %v301 = vsel %vm200, 0.0, %v300
        %v302 = vrot.slane %v297, 4
        %v303 = vsel %vm200, 0.0, %v302
        %305 = vrot.lane.b32.xlu0 %v249, 14
        %v306 = vpop.permute.xlu0 %305
        %309 = vrot.lane.b32.xlu0 %v235, 28
        %v310 = vpop.permute.xlu0 %309
        %313 = vrot.lane.b32.xlu0 %v251, 42
        %v314 = vpop.permute.xlu0 %313
        %317 = vrot.lane.b32.xlu0 %v243, 56
        %v318 = vpop.permute.xlu0 %317
        %321 = vrot.lane.b32.xlu0 %v253, 70
        %v322 = vpop.permute.xlu0 %321
        %325 = vrot.lane.b32.xlu0 %v247, 84
        %v326 = vpop.permute.xlu0 %325
        %329 = vrot.lane.b32.xlu0 %v255, 98
        %v330 = vpop.permute.xlu0 %329
        %333 = vrot.lane.b32.xlu0 %v287, 112
        %v334 = vpop.permute.xlu0 %333
        %337 = vrot.lane.b32.xlu0 %v299, 126
        %v338 = vpop.permute.xlu0 %337
        %341 = vrot.lane.b32.xlu0 %v291, 12
        %v342 = vpop.permute.xlu0 %341
        %345 = vrot.lane.b32.xlu0 %v301, 26
        %v346 = vpop.permute.xlu0 %345
        %349 = vrot.lane.b32.xlu0 %v297, 40
        %v350 = vpop.permute.xlu0 %349
        %353 = vrot.lane.b32.xlu0 %v303, 54
        %v354 = vpop.permute.xlu0 %353
        %vm356 = vcmask 113664
        %v357 = vsel %vm356, %v231, %v306
        %vm358 = vcmask 228352
        %v359 = vsel %vm358, %v357, %v310
        %vm360 = vcmask 343040
        %v361 = vsel %vm360, %v359, %v314
        %vm362 = vcmask 457728
        %v363 = vsel %vm362, %v361, %v318
        %vm364 = vcmask 572416
        %v365 = vsel %vm364, %v363, %v322
        %vm366 = vcmask 687104
        %v367 = vsel %vm366, %v365, %v326
        %vm368 = vcmask 801792
        %v369 = vsel %vm368, %v367, %v330
        %vm370 = vcmask 916480
        %v371 = vsel %vm370, %v369, %v334
        %vm372 = vcmask 1031168
        %v373 = vsel %vm372, %v371, %v338
        %vm374 = vcmask 97280
        %v375 = vsel %vm374, %v338, %v342
        %vm376 = vcmask 211968
        %v377 = vsel %vm376, %v375, %v346
        %vm378 = vcmask 326656
        %v379 = vsel %vm378, %v377, %v350
        %vm380 = vcmask 441344
        %v381 = vsel %vm380, %v379, %v354
        %390 = vrot.lane.b32.xlu0 %v191, 127
        %v391 = vpop.permute.xlu0 %390
        %392 = vrot.lane.b32.xlu0 %v192, 127
        %v393 = vpop.permute.xlu0 %392
        %394 = vrot.lane.b32.xlu0 %v193, 127
        %v395 = vpop.permute.xlu0 %394
        %396 = vrot.lane.b32.xlu0 %v194, 127
        %v397 = vpop.permute.xlu0 %396
        %398 = vrot.lane.b32.xlu0 %v195, 127
        %v399 = vpop.permute.xlu0 %398
        %400 = vrot.lane.b32.xlu0 %v196, 127
        %v401 = vpop.permute.xlu0 %400
        %402 = vrot.lane.b32.xlu0 %v197, 127
        %v403 = vpop.permute.xlu0 %402
        %404 = vrot.lane.b32.xlu0 %v198, 127
        %v405 = vpop.permute.xlu0 %404
        %v414 = vrot.slane %v399, 4
        %v415 = vsel %vm200, %v414, %v391
        %v416 = vrot.slane %v391, 4
        %v417 = vsel %vm200, %v399, %v416
        %v419 = vunpack.c.l.s4 1983009808
        %v420 = vunpack.c.0.s8 %v419
        %v421 = vperm.slane %v415, %v420
        %v423 = vunpack.c.l.s4 1983009808
        %v424 = vunpack.c.0.s8 %v423
        %v425 = vperm.slane %v417, %v424
        %v426 = vrot.slane %v403, 4
        %v427 = vsel %vm200, %v426, %v395
        %v428 = vrot.slane %v395, 4
        %v429 = vsel %vm200, %v403, %v428
        %v431 = vunpack.c.l.s4 1983009808
        %v432 = vunpack.c.0.s8 %v431
        %v433 = vperm.slane %v427, %v432
        %v435 = vunpack.c.l.s4 1983009808
        %v436 = vunpack.c.0.s8 %v435
        %v437 = vperm.slane %v429, %v436
        %v438 = vrot.slane %v433, 4
        %v439 = vsel %vm200, %v438, %v421
        %v440 = vrot.slane %v421, 4
        %v441 = vsel %vm200, %v433, %v440
        %v443 = vunpack.c.l.s4 1934713408
        %v444 = vunpack.c.0.s8 %v443
        %v445 = vperm.slane %v439, %v444
        %v447 = vunpack.c.l.s4 1934713408
        %v448 = vunpack.c.0.s8 %v447
        %v449 = vperm.slane %v441, %v448
        %v450 = vrot.slane %v437, 4
        %v451 = vsel %vm200, %v450, %v425
        %v452 = vrot.slane %v425, 4
        %v453 = vsel %vm200, %v437, %v452
        %v455 = vunpack.c.l.s4 1934713408
        %v456 = vunpack.c.0.s8 %v455
        %v457 = vperm.slane %v451, %v456
        %v459 = vunpack.c.l.s4 1934713408
        %v460 = vunpack.c.0.s8 %v459
        %v461 = vperm.slane %v453, %v460
        %v462 = vrot.slane %v445, 4
        %v463 = vsel %vm200, 0.0, %v462
        %v464 = vrot.slane %v449, 4
        %v465 = vsel %vm200, 0.0, %v464
        %v466 = vrot.slane %v457, 4
        %v467 = vsel %vm200, 0.0, %v466
        %v468 = vrot.slane %v461, 4
        %v469 = vsel %vm200, 0.0, %v468
        %v470 = vrot.slane %v401, 4
        %v471 = vsel %vm200, %v470, %v393
        %v472 = vrot.slane %v393, 4
        %v473 = vsel %vm200, %v401, %v472
        %v475 = vunpack.c.l.s4 1983009808
        %v476 = vunpack.c.0.s8 %v475
        %v477 = vperm.slane %v471, %v476
        %v479 = vunpack.c.l.s4 1983009808
        %v480 = vunpack.c.0.s8 %v479
        %v481 = vperm.slane %v473, %v480
        %v482 = vrot.slane %v405, 4
        %v483 = vsel %vm200, %v482, %v397
        %v484 = vrot.slane %v397, 4
        %v485 = vsel %vm200, %v405, %v484
        %v487 = vunpack.c.l.s4 1983009808
        %v488 = vunpack.c.0.s8 %v487
        %v489 = vperm.slane %v483, %v488
        %v491 = vunpack.c.l.s4 1983009808
        %v492 = vunpack.c.0.s8 %v491
        %v493 = vperm.slane %v485, %v492
        %v494 = vrot.slane %v489, 4
        %v495 = vsel %vm200, %v494, %v477
        %v496 = vrot.slane %v477, 4
        %v497 = vsel %vm200, %v489, %v496
        %v499 = vunpack.c.l.s4 1934713408
        %v500 = vunpack.c.0.s8 %v499
        %v501 = vperm.slane %v495, %v500
        %v503 = vunpack.c.l.s4 1934713408
        %v504 = vunpack.c.0.s8 %v503
        %v505 = vperm.slane %v497, %v504
        %v506 = vrot.slane %v493, 4
        %v507 = vsel %vm200, %v506, %v481
        %v509 = vunpack.c.l.s4 1934713408
        %v510 = vunpack.c.0.s8 %v509
        %v511 = vperm.slane %v507, %v510
        %v512 = vrot.slane %v501, 4
        %v513 = vsel %vm200, 0.0, %v512
        %v514 = vrot.slane %v505, 4
        %v515 = vsel %vm200, 0.0, %v514
        %v516 = vrot.slane %v511, 4
        %v517 = vsel %vm200, 0.0, %v516
        %519 = vrot.lane.b32.xlu0 %v463, 14
        %v520 = vpop.permute.xlu0 %519
        %523 = vrot.lane.b32.xlu0 %v449, 28
        %v524 = vpop.permute.xlu0 %523
        %527 = vrot.lane.b32.xlu0 %v465, 42
        %v528 = vpop.permute.xlu0 %527
        %531 = vrot.lane.b32.xlu0 %v457, 56
        %v532 = vpop.permute.xlu0 %531
        %535 = vrot.lane.b32.xlu0 %v467, 70
        %v536 = vpop.permute.xlu0 %535
        %539 = vrot.lane.b32.xlu0 %v461, 84
        %v540 = vpop.permute.xlu0 %539
        %543 = vrot.lane.b32.xlu0 %v469, 98
        %v544 = vpop.permute.xlu0 %543
        %547 = vrot.lane.b32.xlu0 %v501, 112
        %v548 = vpop.permute.xlu0 %547
        %551 = vrot.lane.b32.xlu0 %v513, 126
        %v552 = vpop.permute.xlu0 %551
        %555 = vrot.lane.b32.xlu0 %v505, 12
        %v556 = vpop.permute.xlu0 %555
        %559 = vrot.lane.b32.xlu0 %v515, 26
        %v560 = vpop.permute.xlu0 %559
        %563 = vrot.lane.b32.xlu0 %v511, 40
        %v564 = vpop.permute.xlu0 %563
        %567 = vrot.lane.b32.xlu0 %v517, 54
        %v568 = vpop.permute.xlu0 %567
        %v570 = vsel %vm356, %v445, %v520
        %v571 = vsel %vm358, %v570, %v524
        %v572 = vsel %vm360, %v571, %v528
        %v573 = vsel %vm362, %v572, %v532
        %v574 = vsel %vm364, %v573, %v536
        %v575 = vsel %vm366, %v574, %v540
        %v576 = vsel %vm368, %v575, %v544
        %v577 = vsel %vm370, %v576, %v548
        %v578 = vsel %vm372, %v577, %v552
        %v579 = vsel %vm374, %v552, %v556
        %v580 = vsel %vm376, %v579, %v560
        %v581 = vsel %vm378, %v580, %v564
        %v582 = vsel %vm380, %v581, %v568
        %583 = vrot.lane.b32.xlu0 %v191, 126
        %v584 = vpop.permute.xlu0 %583
        %585 = vrot.lane.b32.xlu0 %v192, 126
        %v586 = vpop.permute.xlu0 %585
        %587 = vrot.lane.b32.xlu0 %v193, 126
        %v588 = vpop.permute.xlu0 %587
        %589 = vrot.lane.b32.xlu0 %v194, 126
        %v590 = vpop.permute.xlu0 %589
        %591 = vrot.lane.b32.xlu0 %v195, 126
        %v592 = vpop.permute.xlu0 %591
        %593 = vrot.lane.b32.xlu0 %v196, 126
        %v594 = vpop.permute.xlu0 %593
        %595 = vrot.lane.b32.xlu0 %v197, 126
        %v596 = vpop.permute.xlu0 %595
        %597 = vrot.lane.b32.xlu0 %v198, 126
        %v598 = vpop.permute.xlu0 %597
        %v607 = vrot.slane %v592, 4
        %v608 = vsel %vm200, %v607, %v584
        %v609 = vrot.slane %v584, 4
        %v610 = vsel %vm200, %v592, %v609
        %v612 = vunpack.c.l.s4 1983009808
        %v613 = vunpack.c.0.s8 %v612
        %v614 = vperm.slane %v608, %v613
        %v616 = vunpack.c.l.s4 1983009808
        %v617 = vunpack.c.0.s8 %v616
        %v618 = vperm.slane %v610, %v617
        %v619 = vrot.slane %v596, 4
        %v620 = vsel %vm200, %v619, %v588
        %v621 = vrot.slane %v588, 4
        %v622 = vsel %vm200, %v596, %v621
        %v624 = vunpack.c.l.s4 1983009808
        %v625 = vunpack.c.0.s8 %v624
        %v626 = vperm.slane %v620, %v625
        %v628 = vunpack.c.l.s4 1983009808
        %v629 = vunpack.c.0.s8 %v628
        %v630 = vperm.slane %v622, %v629
        %v631 = vrot.slane %v626, 4
        %v632 = vsel %vm200, %v631, %v614
        %v633 = vrot.slane %v614, 4
        %v634 = vsel %vm200, %v626, %v633
        %v636 = vunpack.c.l.s4 1934713408
        %v637 = vunpack.c.0.s8 %v636
        %v638 = vperm.slane %v632, %v637
        %v640 = vunpack.c.l.s4 1934713408
        %v641 = vunpack.c.0.s8 %v640
        %v642 = vperm.slane %v634, %v641
        %v643 = vrot.slane %v630, 4
        %v644 = vsel %vm200, %v643, %v618
        %v645 = vrot.slane %v618, 4
        %v646 = vsel %vm200, %v630, %v645
        %v648 = vunpack.c.l.s4 1934713408
        %v649 = vunpack.c.0.s8 %v648
        %v650 = vperm.slane %v644, %v649
        %v652 = vunpack.c.l.s4 1934713408
        %v653 = vunpack.c.0.s8 %v652
        %v654 = vperm.slane %v646, %v653
        %v655 = vrot.slane %v638, 4
        %v656 = vsel %vm200, 0.0, %v655
        %v657 = vrot.slane %v642, 4
        %v658 = vsel %vm200, 0.0, %v657
        %v659 = vrot.slane %v650, 4
        %v660 = vsel %vm200, 0.0, %v659
        %v661 = vrot.slane %v654, 4
        %v662 = vsel %vm200, 0.0, %v661
        %v663 = vrot.slane %v594, 4
        %v664 = vsel %vm200, %v663, %v586
        %v665 = vrot.slane %v586, 4
        %v666 = vsel %vm200, %v594, %v665
        %v668 = vunpack.c.l.s4 1983009808
        %v669 = vunpack.c.0.s8 %v668
        %v670 = vperm.slane %v664, %v669
        %v672 = vunpack.c.l.s4 1983009808
        %v673 = vunpack.c.0.s8 %v672
        %v674 = vperm.slane %v666, %v673
        %v675 = vrot.slane %v598, 4
        %v676 = vsel %vm200, %v675, %v590
        %v677 = vrot.slane %v590, 4
        %v678 = vsel %vm200, %v598, %v677
        %v680 = vunpack.c.l.s4 1983009808
        %v681 = vunpack.c.0.s8 %v680
        %v682 = vperm.slane %v676, %v681
        %v684 = vunpack.c.l.s4 1983009808
        %v685 = vunpack.c.0.s8 %v684
        %v686 = vperm.slane %v678, %v685
        %v687 = vrot.slane %v682, 4
        %v688 = vsel %vm200, %v687, %v670
        %v689 = vrot.slane %v670, 4
        %v690 = vsel %vm200, %v682, %v689
        %v692 = vunpack.c.l.s4 1934713408
        %v693 = vunpack.c.0.s8 %v692
        %v694 = vperm.slane %v688, %v693
        %v696 = vunpack.c.l.s4 1934713408
        %v697 = vunpack.c.0.s8 %v696
        %v698 = vperm.slane %v690, %v697
        %v699 = vrot.slane %v686, 4
        %v700 = vsel %vm200, %v699, %v674
        %v702 = vunpack.c.l.s4 1934713408
        %v703 = vunpack.c.0.s8 %v702
        %v704 = vperm.slane %v700, %v703
        %v705 = vrot.slane %v694, 4
        %v706 = vsel %vm200, 0.0, %v705
        %v707 = vrot.slane %v698, 4
        %v708 = vsel %vm200, 0.0, %v707
        %v709 = vrot.slane %v704, 4
        %v710 = vsel %vm200, 0.0, %v709
        %712 = vrot.lane.b32.xlu0 %v656, 14
        %v713 = vpop.permute.xlu0 %712
        %716 = vrot.lane.b32.xlu0 %v642, 28
        %v717 = vpop.permute.xlu0 %716
        %720 = vrot.lane.b32.xlu0 %v658, 42
        %v721 = vpop.permute.xlu0 %720
        %724 = vrot.lane.b32.xlu0 %v650, 56
        %v725 = vpop.permute.xlu0 %724
        %728 = vrot.lane.b32.xlu0 %v660, 70
        %v729 = vpop.permute.xlu0 %728
        %732 = vrot.lane.b32.xlu0 %v654, 84
        %v733 = vpop.permute.xlu0 %732
        %736 = vrot.lane.b32.xlu0 %v662, 98
        %v737 = vpop.permute.xlu0 %736
        %740 = vrot.lane.b32.xlu0 %v694, 112
        %v741 = vpop.permute.xlu0 %740
        %744 = vrot.lane.b32.xlu0 %v706, 126
        %v745 = vpop.permute.xlu0 %744
        %748 = vrot.lane.b32.xlu0 %v698, 12
        %v749 = vpop.permute.xlu0 %748
        %752 = vrot.lane.b32.xlu0 %v708, 26
        %v753 = vpop.permute.xlu0 %752
        %756 = vrot.lane.b32.xlu0 %v704, 40
        %v757 = vpop.permute.xlu0 %756
        %760 = vrot.lane.b32.xlu0 %v710, 54
        %v761 = vpop.permute.xlu0 %760
        %v763 = vsel %vm356, %v638, %v713
        %v764 = vsel %vm358, %v763, %v717
        %v765 = vsel %vm360, %v764, %v721
        %v766 = vsel %vm362, %v765, %v725
        %v767 = vsel %vm364, %v766, %v729
        %v768 = vsel %vm366, %v767, %v733
        %v769 = vsel %vm368, %v768, %v737
        %v770 = vsel %vm370, %v769, %v741
        %v771 = vsel %vm372, %v770, %v745
        %v772 = vsel %vm374, %v745, %v749
        %v773 = vsel %vm376, %v772, %v753
        %v774 = vsel %vm378, %v773, %v757
        %v775 = vsel %vm380, %v774, %v761
        %v776 = vld [vmem:[%s167 + $0x1] sm:$0xff]
        %v777 = vld [vmem:[%s167 + $0x9] sm:$0x3f]
        %v778 = vld [vmem:[%s167 + $0x11] sm:$0xff]
        %v779 = vld [vmem:[%s167 + $0x19] sm:$0x3f]
        %v780 = vld [vmem:[%s167 + $0x21] sm:$0xff]
        %v781 = vld [vmem:[%s167 + $0x29] sm:$0x3f]
        %v782 = vld [vmem:[%s167 + $0x31] sm:$0xff]
        %v783 = vld [vmem:[%s167 + $0x39] sm:$0x3f]
        %v784 = vrot.slane %v780, 4
        %v785 = vsel %vm200, %v784, %v776
        %v786 = vrot.slane %v776, 4
        %v787 = vsel %vm200, %v780, %v786
        %v789 = vunpack.c.l.s4 1983009808
        %v790 = vunpack.c.0.s8 %v789
        %v791 = vperm.slane %v785, %v790
        %v793 = vunpack.c.l.s4 1983009808
        %v794 = vunpack.c.0.s8 %v793
        %v795 = vperm.slane %v787, %v794
        %v796 = vrot.slane %v782, 4
        %v797 = vsel %vm200, %v796, %v778
        %v798 = vrot.slane %v778, 4
        %v799 = vsel %vm200, %v782, %v798
        %v801 = vunpack.c.l.s4 1983009808
        %v802 = vunpack.c.0.s8 %v801
        %v803 = vperm.slane %v797, %v802
        %v805 = vunpack.c.l.s4 1983009808
        %v806 = vunpack.c.0.s8 %v805
        %v807 = vperm.slane %v799, %v806
        %v808 = vrot.slane %v803, 4
        %v809 = vsel %vm200, %v808, %v791
        %v810 = vrot.slane %v791, 4
        %v811 = vsel %vm200, %v803, %v810
        %v813 = vunpack.c.l.s4 1934713408
        %v814 = vunpack.c.0.s8 %v813
        %v815 = vperm.slane %v809, %v814
        %v817 = vunpack.c.l.s4 1934713408
        %v818 = vunpack.c.0.s8 %v817
        %v819 = vperm.slane %v811, %v818
        %v820 = vrot.slane %v807, 4
        %v821 = vsel %vm200, %v820, %v795
        %v822 = vrot.slane %v795, 4
        %v823 = vsel %vm200, %v807, %v822
        %v825 = vunpack.c.l.s4 1934713408
        %v826 = vunpack.c.0.s8 %v825
        %v827 = vperm.slane %v821, %v826
        %v829 = vunpack.c.l.s4 1934713408
        %v830 = vunpack.c.0.s8 %v829
        %v831 = vperm.slane %v823, %v830
        %v832 = vrot.slane %v815, 4
        %v833 = vsel %vm200, 0.0, %v832
        %v834 = vrot.slane %v819, 4
        %v835 = vsel %vm200, 0.0, %v834
        %v836 = vrot.slane %v827, 4
        %v837 = vsel %vm200, 0.0, %v836
        %v838 = vrot.slane %v831, 4
        %v839 = vsel %vm200, 0.0, %v838
        %v840 = vrot.slane %v781, 4
        %v841 = vsel %vm200, %v840, %v777
        %v842 = vrot.slane %v777, 4
        %v843 = vsel %vm200, %v781, %v842
        %v845 = vunpack.c.l.s4 1983009808
        %v846 = vunpack.c.0.s8 %v845
        %v847 = vperm.slane %v841, %v846
        %v849 = vunpack.c.l.s4 1983009808
        %v850 = vunpack.c.0.s8 %v849
        %v851 = vperm.slane %v843, %v850
        %v852 = vrot.slane %v783, 4
        %v853 = vsel %vm200, %v852, %v779
        %v854 = vrot.slane %v779, 4
        %v855 = vsel %vm200, %v783, %v854
        %v857 = vunpack.c.l.s4 1983009808
        %v858 = vunpack.c.0.s8 %v857
        %v859 = vperm.slane %v853, %v858
        %v861 = vunpack.c.l.s4 1983009808
        %v862 = vunpack.c.0.s8 %v861
        %v863 = vperm.slane %v855, %v862
        %v864 = vrot.slane %v859, 4
        %v865 = vsel %vm200, %v864, %v847
        %v866 = vrot.slane %v847, 4
        %v867 = vsel %vm200, %v859, %v866
        %v869 = vunpack.c.l.s4 1934713408
        %v870 = vunpack.c.0.s8 %v869
        %v871 = vperm.slane %v865, %v870
        %v873 = vunpack.c.l.s4 1934713408
        %v874 = vunpack.c.0.s8 %v873
        %v875 = vperm.slane %v867, %v874
        %v876 = vrot.slane %v863, 4
        %v877 = vsel %vm200, %v876, %v851
        %v879 = vunpack.c.l.s4 1934713408
        %v880 = vunpack.c.0.s8 %v879
        %v881 = vperm.slane %v877, %v880
        %v882 = vrot.slane %v871, 4
        %v883 = vsel %vm200, 0.0, %v882
        %v884 = vrot.slane %v875, 4
        %v885 = vsel %vm200, 0.0, %v884
        %v886 = vrot.slane %v881, 4
        %v887 = vsel %vm200, 0.0, %v886
        %889 = vrot.lane.b32.xlu0 %v833, 14
        %v890 = vpop.permute.xlu0 %889
        %893 = vrot.lane.b32.xlu0 %v819, 28
        %v894 = vpop.permute.xlu0 %893
        %897 = vrot.lane.b32.xlu0 %v835, 42
        %v898 = vpop.permute.xlu0 %897
        %901 = vrot.lane.b32.xlu0 %v827, 56
        %v902 = vpop.permute.xlu0 %901
        %905 = vrot.lane.b32.xlu0 %v837, 70
        %v906 = vpop.permute.xlu0 %905
        %909 = vrot.lane.b32.xlu0 %v831, 84
        %v910 = vpop.permute.xlu0 %909
        %913 = vrot.lane.b32.xlu0 %v839, 98
        %v914 = vpop.permute.xlu0 %913
        %917 = vrot.lane.b32.xlu0 %v871, 112
        %v918 = vpop.permute.xlu0 %917
        %921 = vrot.lane.b32.xlu0 %v883, 126
        %v922 = vpop.permute.xlu0 %921
        %925 = vrot.lane.b32.xlu0 %v875, 12
        %v926 = vpop.permute.xlu0 %925
        %929 = vrot.lane.b32.xlu0 %v885, 26
        %v930 = vpop.permute.xlu0 %929
        %933 = vrot.lane.b32.xlu0 %v881, 40
        %v934 = vpop.permute.xlu0 %933
        %937 = vrot.lane.b32.xlu0 %v887, 54
        %v938 = vpop.permute.xlu0 %937
        %v940 = vsel %vm356, %v815, %v890
        %v941 = vsel %vm358, %v940, %v894
        %v942 = vsel %vm360, %v941, %v898
        %v943 = vsel %vm362, %v942, %v902
        %v944 = vsel %vm364, %v943, %v906
        %v945 = vsel %vm366, %v944, %v910
        %v946 = vsel %vm368, %v945, %v914
        %v947 = vsel %vm370, %v946, %v918
        %v948 = vsel %vm372, %v947, %v922
        %v949 = vsel %vm374, %v922, %v926
        %v950 = vsel %vm376, %v949, %v930
        %v951 = vsel %vm378, %v950, %v934
        %v952 = vsel %vm380, %v951, %v938
        %961 = vrot.lane.b32.xlu0 %v776, 127
        %v962 = vpop.permute.xlu0 %961
        %963 = vrot.lane.b32.xlu0 %v777, 127
        %v964 = vpop.permute.xlu0 %963
        %965 = vrot.lane.b32.xlu0 %v778, 127
        %v966 = vpop.permute.xlu0 %965
        %967 = vrot.lane.b32.xlu0 %v779, 127
        %v968 = vpop.permute.xlu0 %967
        %969 = vrot.lane.b32.xlu0 %v780, 127
        %v970 = vpop.permute.xlu0 %969
        %971 = vrot.lane.b32.xlu0 %v781, 127
        %v972 = vpop.permute.xlu0 %971
        %973 = vrot.lane.b32.xlu0 %v782, 127
        %v974 = vpop.permute.xlu0 %973
        %975 = vrot.lane.b32.xlu0 %v783, 127
        %v976 = vpop.permute.xlu0 %975
        %v985 = vrot.slane %v970, 4
        %v986 = vsel %vm200, %v985, %v962
        %v987 = vrot.slane %v962, 4
        %v988 = vsel %vm200, %v970, %v987
        %v990 = vunpack.c.l.s4 1983009808
        %v991 = vunpack.c.0.s8 %v990
        %v992 = vperm.slane %v986, %v991
        %v994 = vunpack.c.l.s4 1983009808
        %v995 = vunpack.c.0.s8 %v994
        %v996 = vperm.slane %v988, %v995
        %v997 = vrot.slane %v974, 4
        %v998 = vsel %vm200, %v997, %v966
        %v999 = vrot.slane %v966, 4
        %v1000 = vsel %vm200, %v974, %v999
        %v1002 = vunpack.c.l.s4 1983009808
        %v1003 = vunpack.c.0.s8 %v1002
        %v1004 = vperm.slane %v998, %v1003
        %v1006 = vunpack.c.l.s4 1983009808
        %v1007 = vunpack.c.0.s8 %v1006
        %v1008 = vperm.slane %v1000, %v1007
        %v1009 = vrot.slane %v1004, 4
        %v1010 = vsel %vm200, %v1009, %v992
        %v1011 = vrot.slane %v992, 4
        %v1012 = vsel %vm200, %v1004, %v1011
        %v1014 = vunpack.c.l.s4 1934713408
        %v1015 = vunpack.c.0.s8 %v1014
        %v1016 = vperm.slane %v1010, %v1015
        %v1018 = vunpack.c.l.s4 1934713408
        %v1019 = vunpack.c.0.s8 %v1018
        %v1020 = vperm.slane %v1012, %v1019
        %v1021 = vrot.slane %v1008, 4
        %v1022 = vsel %vm200, %v1021, %v996
        %v1023 = vrot.slane %v996, 4
        %v1024 = vsel %vm200, %v1008, %v1023
        %v1026 = vunpack.c.l.s4 1934713408
        %v1027 = vunpack.c.0.s8 %v1026
        %v1028 = vperm.slane %v1022, %v1027
        %v1030 = vunpack.c.l.s4 1934713408
        %v1031 = vunpack.c.0.s8 %v1030
        %v1032 = vperm.slane %v1024, %v1031
        %v1033 = vrot.slane %v1016, 4
        %v1034 = vsel %vm200, 0.0, %v1033
        %v1035 = vrot.slane %v1020, 4
        %v1036 = vsel %vm200, 0.0, %v1035
        %v1037 = vrot.slane %v1028, 4
        %v1038 = vsel %vm200, 0.0, %v1037
        %v1039 = vrot.slane %v1032, 4
        %v1040 = vsel %vm200, 0.0, %v1039
        %v1041 = vrot.slane %v972, 4
        %v1042 = vsel %vm200, %v1041, %v964
        %v1043 = vrot.slane %v964, 4
        %v1044 = vsel %vm200, %v972, %v1043
        %v1046 = vunpack.c.l.s4 1983009808
        %v1047 = vunpack.c.0.s8 %v1046
        %v1048 = vperm.slane %v1042, %v1047
        %v1050 = vunpack.c.l.s4 1983009808
        %v1051 = vunpack.c.0.s8 %v1050
        %v1052 = vperm.slane %v1044, %v1051
        %v1053 = vrot.slane %v976, 4
        %v1054 = vsel %vm200, %v1053, %v968
        %v1055 = vrot.slane %v968, 4
        %v1056 = vsel %vm200, %v976, %v1055
        %v1058 = vunpack.c.l.s4 1983009808
        %v1059 = vunpack.c.0.s8 %v1058
        %v1060 = vperm.slane %v1054, %v1059
        %v1062 = vunpack.c.l.s4 1983009808
        %v1063 = vunpack.c.0.s8 %v1062
        %v1064 = vperm.slane %v1056, %v1063
        %v1065 = vrot.slane %v1060, 4
        %v1066 = vsel %vm200, %v1065, %v1048
        %v1067 = vrot.slane %v1048, 4
        %v1068 = vsel %vm200, %v1060, %v1067
        %v1070 = vunpack.c.l.s4 1934713408
        %v1071 = vunpack.c.0.s8 %v1070
        %v1072 = vperm.slane %v1066, %v1071
        %v1074 = vunpack.c.l.s4 1934713408
        %v1075 = vunpack.c.0.s8 %v1074
        %v1076 = vperm.slane %v1068, %v1075
        %v1077 = vrot.slane %v1064, 4
        %v1078 = vsel %vm200, %v1077, %v1052
        %v1080 = vunpack.c.l.s4 1934713408
        %v1081 = vunpack.c.0.s8 %v1080
        %v1082 = vperm.slane %v1078, %v1081
        %v1083 = vrot.slane %v1072, 4
        %v1084 = vsel %vm200, 0.0, %v1083
        %v1085 = vrot.slane %v1076, 4
        %v1086 = vsel %vm200, 0.0, %v1085
        %v1087 = vrot.slane %v1082, 4
        %v1088 = vsel %vm200, 0.0, %v1087
        %1090 = vrot.lane.b32.xlu0 %v1034, 14
        %v1091 = vpop.permute.xlu0 %1090
        %1094 = vrot.lane.b32.xlu0 %v1020, 28
        %v1095 = vpop.permute.xlu0 %1094
        %1098 = vrot.lane.b32.xlu0 %v1036, 42
        %v1099 = vpop.permute.xlu0 %1098
        %1102 = vrot.lane.b32.xlu0 %v1028, 56
        %v1103 = vpop.permute.xlu0 %1102
        %1106 = vrot.lane.b32.xlu0 %v1038, 70
        %v1107 = vpop.permute.xlu0 %1106
        %1110 = vrot.lane.b32.xlu0 %v1032, 84
        %v1111 = vpop.permute.xlu0 %1110
        %1114 = vrot.lane.b32.xlu0 %v1040, 98
        %v1115 = vpop.permute.xlu0 %1114
        %1118 = vrot.lane.b32.xlu0 %v1072, 112
        %v1119 = vpop.permute.xlu0 %1118
        %1122 = vrot.lane.b32.xlu0 %v1084, 126
        %v1123 = vpop.permute.xlu0 %1122
        %1126 = vrot.lane.b32.xlu0 %v1076, 12
        %v1127 = vpop.permute.xlu0 %1126
        %1130 = vrot.lane.b32.xlu0 %v1086, 26
        %v1131 = vpop.permute.xlu0 %1130
        %1134 = vrot.lane.b32.xlu0 %v1082, 40
        %v1135 = vpop.permute.xlu0 %1134
        %1138 = vrot.lane.b32.xlu0 %v1088, 54
        %v1139 = vpop.permute.xlu0 %1138
        %v1141 = vsel %vm356, %v1016, %v1091
        %v1142 = vsel %vm358, %v1141, %v1095
        %v1143 = vsel %vm360, %v1142, %v1099
        %v1144 = vsel %vm362, %v1143, %v1103
        %v1145 = vsel %vm364, %v1144, %v1107
        %v1146 = vsel %vm366, %v1145, %v1111
        %v1147 = vsel %vm368, %v1146, %v1115
        %v1148 = vsel %vm370, %v1147, %v1119
        %v1149 = vsel %vm372, %v1148, %v1123
        %v1150 = vsel %vm374, %v1123, %v1127
        %v1151 = vsel %vm376, %v1150, %v1131
        %v1152 = vsel %vm378, %v1151, %v1135
        %v1153 = vsel %vm380, %v1152, %v1139
        %1154 = vrot.lane.b32.xlu0 %v776, 126
        %v1155 = vpop.permute.xlu0 %1154
        %1156 = vrot.lane.b32.xlu0 %v777, 126
        %v1157 = vpop.permute.xlu0 %1156
        %1158 = vrot.lane.b32.xlu0 %v778, 126
        %v1159 = vpop.permute.xlu0 %1158
        %1160 = vrot.lane.b32.xlu0 %v779, 126
        %v1161 = vpop.permute.xlu0 %1160
        %1162 = vrot.lane.b32.xlu0 %v780, 126
        %v1163 = vpop.permute.xlu0 %1162
        %1164 = vrot.lane.b32.xlu0 %v781, 126
        %v1165 = vpop.permute.xlu0 %1164
        %1166 = vrot.lane.b32.xlu0 %v782, 126
        %v1167 = vpop.permute.xlu0 %1166
        %1168 = vrot.lane.b32.xlu0 %v783, 126
        %v1169 = vpop.permute.xlu0 %1168
        %v1178 = vrot.slane %v1163, 4
        %v1179 = vsel %vm200, %v1178, %v1155
        %v1180 = vrot.slane %v1155, 4
        %v1181 = vsel %vm200, %v1163, %v1180
        %v1183 = vunpack.c.l.s4 1983009808
        %v1184 = vunpack.c.0.s8 %v1183
        %v1185 = vperm.slane %v1179, %v1184
        %v1187 = vunpack.c.l.s4 1983009808
        %v1188 = vunpack.c.0.s8 %v1187
        %v1189 = vperm.slane %v1181, %v1188
        %v1190 = vrot.slane %v1167, 4
        %v1191 = vsel %vm200, %v1190, %v1159
        %v1192 = vrot.slane %v1159, 4
        %v1193 = vsel %vm200, %v1167, %v1192
        %v1195 = vunpack.c.l.s4 1983009808
        %v1196 = vunpack.c.0.s8 %v1195
        %v1197 = vperm.slane %v1191, %v1196
        %v1199 = vunpack.c.l.s4 1983009808
        %v1200 = vunpack.c.0.s8 %v1199
        %v1201 = vperm.slane %v1193, %v1200
        %v1202 = vrot.slane %v1197, 4
        %v1203 = vsel %vm200, %v1202, %v1185
        %v1204 = vrot.slane %v1185, 4
        %v1205 = vsel %vm200, %v1197, %v1204
        %v1207 = vunpack.c.l.s4 1934713408
        %v1208 = vunpack.c.0.s8 %v1207
        %v1209 = vperm.slane %v1203, %v1208
        %v1211 = vunpack.c.l.s4 1934713408
        %v1212 = vunpack.c.0.s8 %v1211
        %v1213 = vperm.slane %v1205, %v1212
        %v1214 = vrot.slane %v1201, 4
        %v1215 = vsel %vm200, %v1214, %v1189
        %v1216 = vrot.slane %v1189, 4
        %v1217 = vsel %vm200, %v1201, %v1216
        %v1219 = vunpack.c.l.s4 1934713408
        %v1220 = vunpack.c.0.s8 %v1219
        %v1221 = vperm.slane %v1215, %v1220
        %v1223 = vunpack.c.l.s4 1934713408
        %v1224 = vunpack.c.0.s8 %v1223
        %v1225 = vperm.slane %v1217, %v1224
        %v1226 = vrot.slane %v1209, 4
        %v1227 = vsel %vm200, 0.0, %v1226
        %v1228 = vrot.slane %v1213, 4
        %v1229 = vsel %vm200, 0.0, %v1228
        %v1230 = vrot.slane %v1221, 4
        %v1231 = vsel %vm200, 0.0, %v1230
        %v1232 = vrot.slane %v1225, 4
        %v1233 = vsel %vm200, 0.0, %v1232
        %v1234 = vrot.slane %v1165, 4
        %v1235 = vsel %vm200, %v1234, %v1157
        %v1236 = vrot.slane %v1157, 4
        %v1237 = vsel %vm200, %v1165, %v1236
        %v1239 = vunpack.c.l.s4 1983009808
        %v1240 = vunpack.c.0.s8 %v1239
        %v1241 = vperm.slane %v1235, %v1240
        %v1243 = vunpack.c.l.s4 1983009808
        %v1244 = vunpack.c.0.s8 %v1243
        %v1245 = vperm.slane %v1237, %v1244
        %v1246 = vrot.slane %v1169, 4
        %v1247 = vsel %vm200, %v1246, %v1161
        %v1248 = vrot.slane %v1161, 4
        %v1249 = vsel %vm200, %v1169, %v1248
        %v1251 = vunpack.c.l.s4 1983009808
        %v1252 = vunpack.c.0.s8 %v1251
        %v1253 = vperm.slane %v1247, %v1252
        %v1255 = vunpack.c.l.s4 1983009808
        %v1256 = vunpack.c.0.s8 %v1255
        %v1257 = vperm.slane %v1249, %v1256
        %v1258 = vrot.slane %v1253, 4
        %v1259 = vsel %vm200, %v1258, %v1241
        %v1260 = vrot.slane %v1241, 4
        %v1261 = vsel %vm200, %v1253, %v1260
        %v1263 = vunpack.c.l.s4 1934713408
        %v1264 = vunpack.c.0.s8 %v1263
        %v1265 = vperm.slane %v1259, %v1264
        %v1267 = vunpack.c.l.s4 1934713408
        %v1268 = vunpack.c.0.s8 %v1267
        %v1269 = vperm.slane %v1261, %v1268
        %v1270 = vrot.slane %v1257, 4
        %v1271 = vsel %vm200, %v1270, %v1245
        %v1273 = vunpack.c.l.s4 1934713408
        %v1274 = vunpack.c.0.s8 %v1273
        %v1275 = vperm.slane %v1271, %v1274
        %v1276 = vrot.slane %v1265, 4
        %v1277 = vsel %vm200, 0.0, %v1276
        %v1278 = vrot.slane %v1269, 4
        %v1279 = vsel %vm200, 0.0, %v1278
        %v1280 = vrot.slane %v1275, 4
        %v1281 = vsel %vm200, 0.0, %v1280
        %1283 = vrot.lane.b32.xlu0 %v1227, 14
        %v1284 = vpop.permute.xlu0 %1283
        %1287 = vrot.lane.b32.xlu0 %v1213, 28
        %v1288 = vpop.permute.xlu0 %1287
        %1291 = vrot.lane.b32.xlu0 %v1229, 42
        %v1292 = vpop.permute.xlu0 %1291
        %1295 = vrot.lane.b32.xlu0 %v1221, 56
        %v1296 = vpop.permute.xlu0 %1295
        %1299 = vrot.lane.b32.xlu0 %v1231, 70
        %v1300 = vpop.permute.xlu0 %1299
        %1303 = vrot.lane.b32.xlu0 %v1225, 84
        %v1304 = vpop.permute.xlu0 %1303
        %1307 = vrot.lane.b32.xlu0 %v1233, 98
        %v1308 = vpop.permute.xlu0 %1307
        %1311 = vrot.lane.b32.xlu0 %v1265, 112
        %v1312 = vpop.permute.xlu0 %1311
        %1315 = vrot.lane.b32.xlu0 %v1277, 126
        %v1316 = vpop.permute.xlu0 %1315
        %1319 = vrot.lane.b32.xlu0 %v1269, 12
        %v1320 = vpop.permute.xlu0 %1319
        %1323 = vrot.lane.b32.xlu0 %v1279, 26
        %v1324 = vpop.permute.xlu0 %1323
        %1327 = vrot.lane.b32.xlu0 %v1275, 40
        %v1328 = vpop.permute.xlu0 %1327
        %1331 = vrot.lane.b32.xlu0 %v1281, 54
        %v1332 = vpop.permute.xlu0 %1331
        %v1334 = vsel %vm356, %v1209, %v1284
        %v1335 = vsel %vm358, %v1334, %v1288
        %v1336 = vsel %vm360, %v1335, %v1292
        %v1337 = vsel %vm362, %v1336, %v1296
        %v1338 = vsel %vm364, %v1337, %v1300
        %v1339 = vsel %vm366, %v1338, %v1304
        %v1340 = vsel %vm368, %v1339, %v1308
        %v1341 = vsel %vm370, %v1340, %v1312
        %v1342 = vsel %vm372, %v1341, %v1316
        %v1343 = vsel %vm374, %v1316, %v1320
        %v1344 = vsel %vm376, %v1343, %v1324
        %v1345 = vsel %vm378, %v1344, %v1328
        %v1346 = vsel %vm380, %v1345, %v1332
        %v1347 = vld [vmem:[%s167 + $0x2] sm:$0xff]
        %v1348 = vld [vmem:[%s167 + $0xa] sm:$0x3f]
        %v1349 = vld [vmem:[%s167 + $0x12] sm:$0xff]
        %v1350 = vld [vmem:[%s167 + $0x1a] sm:$0x3f]
        %v1351 = vld [vmem:[%s167 + $0x22] sm:$0xff]
        %v1352 = vld [vmem:[%s167 + $0x2a] sm:$0x3f]
        %v1353 = vld [vmem:[%s167 + $0x32] sm:$0xff]
        %v1354 = vld [vmem:[%s167 + $0x3a] sm:$0x3f]
        %v1355 = vrot.slane %v1351, 4
        %v1356 = vsel %vm200, %v1355, %v1347
        %v1357 = vrot.slane %v1347, 4
        %v1358 = vsel %vm200, %v1351, %v1357
        %v1360 = vunpack.c.l.s4 1983009808
        %v1361 = vunpack.c.0.s8 %v1360
        %v1362 = vperm.slane %v1356, %v1361
        %v1364 = vunpack.c.l.s4 1983009808
        %v1365 = vunpack.c.0.s8 %v1364
        %v1366 = vperm.slane %v1358, %v1365
        %v1367 = vrot.slane %v1353, 4
        %v1368 = vsel %vm200, %v1367, %v1349
        %v1369 = vrot.slane %v1349, 4
        %v1370 = vsel %vm200, %v1353, %v1369
        %v1372 = vunpack.c.l.s4 1983009808
        %v1373 = vunpack.c.0.s8 %v1372
        %v1374 = vperm.slane %v1368, %v1373
        %v1376 = vunpack.c.l.s4 1983009808
        %v1377 = vunpack.c.0.s8 %v1376
        %v1378 = vperm.slane %v1370, %v1377
        %v1379 = vrot.slane %v1374, 4
        %v1380 = vsel %vm200, %v1379, %v1362
        %v1381 = vrot.slane %v1362, 4
        %v1382 = vsel %vm200, %v1374, %v1381
        %v1384 = vunpack.c.l.s4 1934713408
        %v1385 = vunpack.c.0.s8 %v1384
        %v1386 = vperm.slane %v1380, %v1385
        %v1388 = vunpack.c.l.s4 1934713408
        %v1389 = vunpack.c.0.s8 %v1388
        %v1390 = vperm.slane %v1382, %v1389
        %v1391 = vrot.slane %v1378, 4
        %v1392 = vsel %vm200, %v1391, %v1366
        %v1393 = vrot.slane %v1366, 4
        %v1394 = vsel %vm200, %v1378, %v1393
        %v1396 = vunpack.c.l.s4 1934713408
        %v1397 = vunpack.c.0.s8 %v1396
        %v1398 = vperm.slane %v1392, %v1397
        %v1400 = vunpack.c.l.s4 1934713408
        %v1401 = vunpack.c.0.s8 %v1400
        %v1402 = vperm.slane %v1394, %v1401
        %v1403 = vrot.slane %v1386, 4
        %v1404 = vsel %vm200, 0.0, %v1403
        %v1405 = vrot.slane %v1390, 4
        %v1406 = vsel %vm200, 0.0, %v1405
        %v1407 = vrot.slane %v1398, 4
        %v1408 = vsel %vm200, 0.0, %v1407
        %v1409 = vrot.slane %v1402, 4
        %v1410 = vsel %vm200, 0.0, %v1409
        %v1411 = vrot.slane %v1352, 4
        %v1412 = vsel %vm200, %v1411, %v1348
        %v1413 = vrot.slane %v1348, 4
        %v1414 = vsel %vm200, %v1352, %v1413
        %v1416 = vunpack.c.l.s4 1983009808
        %v1417 = vunpack.c.0.s8 %v1416
        %v1418 = vperm.slane %v1412, %v1417
        %v1420 = vunpack.c.l.s4 1983009808
        %v1421 = vunpack.c.0.s8 %v1420
        %v1422 = vperm.slane %v1414, %v1421
        %v1423 = vrot.slane %v1354, 4
        %v1424 = vsel %vm200, %v1423, %v1350
        %v1425 = vrot.slane %v1350, 4
        %v1426 = vsel %vm200, %v1354, %v1425
        %v1428 = vunpack.c.l.s4 1983009808
        %v1429 = vunpack.c.0.s8 %v1428
        %v1430 = vperm.slane %v1424, %v1429
        %v1432 = vunpack.c.l.s4 1983009808
        %v1433 = vunpack.c.0.s8 %v1432
        %v1434 = vperm.slane %v1426, %v1433
        %v1435 = vrot.slane %v1430, 4
        %v1436 = vsel %vm200, %v1435, %v1418
        %v1437 = vrot.slane %v1418, 4
        %v1438 = vsel %vm200, %v1430, %v1437
        %v1440 = vunpack.c.l.s4 1934713408
        %v1441 = vunpack.c.0.s8 %v1440
        %v1442 = vperm.slane %v1436, %v1441
        %v1444 = vunpack.c.l.s4 1934713408
        %v1445 = vunpack.c.0.s8 %v1444
        %v1446 = vperm.slane %v1438, %v1445
        %v1447 = vrot.slane %v1434, 4
        %v1448 = vsel %vm200, %v1447, %v1422
        %v1450 = vunpack.c.l.s4 1934713408
        %v1451 = vunpack.c.0.s8 %v1450
        %v1452 = vperm.slane %v1448, %v1451
        %v1453 = vrot.slane %v1442, 4
        %v1454 = vsel %vm200, 0.0, %v1453
        %v1455 = vrot.slane %v1446, 4
        %v1456 = vsel %vm200, 0.0, %v1455
        %v1457 = vrot.slane %v1452, 4
        %v1458 = vsel %vm200, 0.0, %v1457
        %1460 = vrot.lane.b32.xlu0 %v1404, 14
        %v1461 = vpop.permute.xlu0 %1460
        %1464 = vrot.lane.b32.xlu0 %v1390, 28
        %v1465 = vpop.permute.xlu0 %1464
        %1468 = vrot.lane.b32.xlu0 %v1406, 42
        %v1469 = vpop.permute.xlu0 %1468
        %1472 = vrot.lane.b32.xlu0 %v1398, 56
        %v1473 = vpop.permute.xlu0 %1472
        %1476 = vrot.lane.b32.xlu0 %v1408, 70
        %v1477 = vpop.permute.xlu0 %1476
        %1480 = vrot.lane.b32.xlu0 %v1402, 84
        %v1481 = vpop.permute.xlu0 %1480
        %1484 = vrot.lane.b32.xlu0 %v1410, 98
        %v1485 = vpop.permute.xlu0 %1484
        %1488 = vrot.lane.b32.xlu0 %v1442, 112
        %v1489 = vpop.permute.xlu0 %1488
        %1492 = vrot.lane.b32.xlu0 %v1454, 126
        %v1493 = vpop.permute.xlu0 %1492
        %1496 = vrot.lane.b32.xlu0 %v1446, 12
        %v1497 = vpop.permute.xlu0 %1496
        %1500 = vrot.lane.b32.xlu0 %v1456, 26
        %v1501 = vpop.permute.xlu0 %1500
        %1504 = vrot.lane.b32.xlu0 %v1452, 40
        %v1505 = vpop.permute.xlu0 %1504
        %1508 = vrot.lane.b32.xlu0 %v1458, 54
        %v1509 = vpop.permute.xlu0 %1508
        %v1511 = vsel %vm356, %v1386, %v1461
        %v1512 = vsel %vm358, %v1511, %v1465
        %v1513 = vsel %vm360, %v1512, %v1469
        %v1514 = vsel %vm362, %v1513, %v1473
        %v1515 = vsel %vm364, %v1514, %v1477
        %v1516 = vsel %vm366, %v1515, %v1481
        %v1517 = vsel %vm368, %v1516, %v1485
        %v1518 = vsel %vm370, %v1517, %v1489
        %v1519 = vsel %vm372, %v1518, %v1493
        %v1520 = vsel %vm374, %v1493, %v1497
        %v1521 = vsel %vm376, %v1520, %v1501
        %v1522 = vsel %vm378, %v1521, %v1505
        %v1523 = vsel %vm380, %v1522, %v1509
        %1532 = vrot.lane.b32.xlu0 %v1347, 127
        %v1533 = vpop.permute.xlu0 %1532
        %1534 = vrot.lane.b32.xlu0 %v1348, 127
        %v1535 = vpop.permute.xlu0 %1534
        %1536 = vrot.lane.b32.xlu0 %v1349, 127
        %v1537 = vpop.permute.xlu0 %1536
        %1538 = vrot.lane.b32.xlu0 %v1350, 127
        %v1539 = vpop.permute.xlu0 %1538
        %1540 = vrot.lane.b32.xlu0 %v1351, 127
        %v1541 = vpop.permute.xlu0 %1540
        %1542 = vrot.lane.b32.xlu0 %v1352, 127
        %v1543 = vpop.permute.xlu0 %1542
        %1544 = vrot.lane.b32.xlu0 %v1353, 127
        %v1545 = vpop.permute.xlu0 %1544
        %1546 = vrot.lane.b32.xlu0 %v1354, 127
        %v1547 = vpop.permute.xlu0 %1546
        %v1556 = vrot.slane %v1541, 4
        %v1557 = vsel %vm200, %v1556, %v1533
        %v1558 = vrot.slane %v1533, 4
        %v1559 = vsel %vm200, %v1541, %v1558
        %v1561 = vunpack.c.l.s4 1983009808
        %v1562 = vunpack.c.0.s8 %v1561
        %v1563 = vperm.slane %v1557, %v1562
        %v1565 = vunpack.c.l.s4 1983009808
        %v1566 = vunpack.c.0.s8 %v1565
        %v1567 = vperm.slane %v1559, %v1566
        %v1568 = vrot.slane %v1545, 4
        %v1569 = vsel %vm200, %v1568, %v1537
        %v1570 = vrot.slane %v1537, 4
        %v1571 = vsel %vm200, %v1545, %v1570
        %v1573 = vunpack.c.l.s4 1983009808
        %v1574 = vunpack.c.0.s8 %v1573
        %v1575 = vperm.slane %v1569, %v1574
        %v1577 = vunpack.c.l.s4 1983009808
        %v1578 = vunpack.c.0.s8 %v1577
        %v1579 = vperm.slane %v1571, %v1578
        %v1580 = vrot.slane %v1575, 4
        %v1581 = vsel %vm200, %v1580, %v1563
        %v1582 = vrot.slane %v1563, 4
        %v1583 = vsel %vm200, %v1575, %v1582
        %v1585 = vunpack.c.l.s4 1934713408
        %v1586 = vunpack.c.0.s8 %v1585
        %v1587 = vperm.slane %v1581, %v1586
        %v1589 = vunpack.c.l.s4 1934713408
        %v1590 = vunpack.c.0.s8 %v1589
        %v1591 = vperm.slane %v1583, %v1590
        %v1592 = vrot.slane %v1579, 4
        %v1593 = vsel %vm200, %v1592, %v1567
        %v1594 = vrot.slane %v1567, 4
        %v1595 = vsel %vm200, %v1579, %v1594
        %v1597 = vunpack.c.l.s4 1934713408
        %v1598 = vunpack.c.0.s8 %v1597
        %v1599 = vperm.slane %v1593, %v1598
        %v1601 = vunpack.c.l.s4 1934713408
        %v1602 = vunpack.c.0.s8 %v1601
        %v1603 = vperm.slane %v1595, %v1602
        %v1604 = vrot.slane %v1587, 4
        %v1605 = vsel %vm200, 0.0, %v1604
        %v1606 = vrot.slane %v1591, 4
        %v1607 = vsel %vm200, 0.0, %v1606
        %v1608 = vrot.slane %v1599, 4
        %v1609 = vsel %vm200, 0.0, %v1608
        %v1610 = vrot.slane %v1603, 4
        %v1611 = vsel %vm200, 0.0, %v1610
        %v1612 = vrot.slane %v1543, 4
        %v1613 = vsel %vm200, %v1612, %v1535
        %v1614 = vrot.slane %v1535, 4
        %v1615 = vsel %vm200, %v1543, %v1614
        %v1617 = vunpack.c.l.s4 1983009808
        %v1618 = vunpack.c.0.s8 %v1617
        %v1619 = vperm.slane %v1613, %v1618
        %v1621 = vunpack.c.l.s4 1983009808
        %v1622 = vunpack.c.0.s8 %v1621
        %v1623 = vperm.slane %v1615, %v1622
        %v1624 = vrot.slane %v1547, 4
        %v1625 = vsel %vm200, %v1624, %v1539
        %v1626 = vrot.slane %v1539, 4
        %v1627 = vsel %vm200, %v1547, %v1626
        %v1629 = vunpack.c.l.s4 1983009808
        %v1630 = vunpack.c.0.s8 %v1629
        %v1631 = vperm.slane %v1625, %v1630
        %v1633 = vunpack.c.l.s4 1983009808
        %v1634 = vunpack.c.0.s8 %v1633
        %v1635 = vperm.slane %v1627, %v1634
        %v1636 = vrot.slane %v1631, 4
        %v1637 = vsel %vm200, %v1636, %v1619
        %v1638 = vrot.slane %v1619, 4
        %v1639 = vsel %vm200, %v1631, %v1638
        %v1641 = vunpack.c.l.s4 1934713408
        %v1642 = vunpack.c.0.s8 %v1641
        %v1643 = vperm.slane %v1637, %v1642
        %v1645 = vunpack.c.l.s4 1934713408
        %v1646 = vunpack.c.0.s8 %v1645
        %v1647 = vperm.slane %v1639, %v1646
        %v1648 = vrot.slane %v1635, 4
        %v1649 = vsel %vm200, %v1648, %v1623
        %v1651 = vunpack.c.l.s4 1934713408
        %v1652 = vunpack.c.0.s8 %v1651
        %v1653 = vperm.slane %v1649, %v1652
        %v1654 = vrot.slane %v1643, 4
        %v1655 = vsel %vm200, 0.0, %v1654
        %v1656 = vrot.slane %v1647, 4
        %v1657 = vsel %vm200, 0.0, %v1656
        %v1658 = vrot.slane %v1653, 4
        %v1659 = vsel %vm200, 0.0, %v1658
        %1661 = vrot.lane.b32.xlu0 %v1605, 14
        %v1662 = vpop.permute.xlu0 %1661
        %1665 = vrot.lane.b32.xlu0 %v1591, 28
        %v1666 = vpop.permute.xlu0 %1665
        %1669 = vrot.lane.b32.xlu0 %v1607, 42
        %v1670 = vpop.permute.xlu0 %1669
        %1673 = vrot.lane.b32.xlu0 %v1599, 56
        %v1674 = vpop.permute.xlu0 %1673
        %1677 = vrot.lane.b32.xlu0 %v1609, 70
        %v1678 = vpop.permute.xlu0 %1677
        %1681 = vrot.lane.b32.xlu0 %v1603, 84
        %v1682 = vpop.permute.xlu0 %1681
        %1685 = vrot.lane.b32.xlu0 %v1611, 98
        %v1686 = vpop.permute.xlu0 %1685
        %1689 = vrot.lane.b32.xlu0 %v1643, 112
        %v1690 = vpop.permute.xlu0 %1689
        %1693 = vrot.lane.b32.xlu0 %v1655, 126
        %v1694 = vpop.permute.xlu0 %1693
        %1697 = vrot.lane.b32.xlu0 %v1647, 12
        %v1698 = vpop.permute.xlu0 %1697
        %1701 = vrot.lane.b32.xlu0 %v1657, 26
        %v1702 = vpop.permute.xlu0 %1701
        %1705 = vrot.lane.b32.xlu0 %v1653, 40
        %v1706 = vpop.permute.xlu0 %1705
        %1709 = vrot.lane.b32.xlu0 %v1659, 54
        %v1710 = vpop.permute.xlu0 %1709
        %v1712 = vsel %vm356, %v1587, %v1662
        %v1713 = vsel %vm358, %v1712, %v1666
        %v1714 = vsel %vm360, %v1713, %v1670
        %v1715 = vsel %vm362, %v1714, %v1674
        %v1716 = vsel %vm364, %v1715, %v1678
        %v1717 = vsel %vm366, %v1716, %v1682
        %v1718 = vsel %vm368, %v1717, %v1686
        %v1719 = vsel %vm370, %v1718, %v1690
        %v1720 = vsel %vm372, %v1719, %v1694
        %v1721 = vsel %vm374, %v1694, %v1698
        %v1722 = vsel %vm376, %v1721, %v1702
        %v1723 = vsel %vm378, %v1722, %v1706
        %v1724 = vsel %vm380, %v1723, %v1710
        %1725 = vrot.lane.b32.xlu0 %v1347, 126
        %v1726 = vpop.permute.xlu0 %1725
        %1727 = vrot.lane.b32.xlu0 %v1348, 126
        %v1728 = vpop.permute.xlu0 %1727
        %1729 = vrot.lane.b32.xlu0 %v1349, 126
        %v1730 = vpop.permute.xlu0 %1729
        %1731 = vrot.lane.b32.xlu0 %v1350, 126
        %v1732 = vpop.permute.xlu0 %1731
        %1733 = vrot.lane.b32.xlu0 %v1351, 126
        %v1734 = vpop.permute.xlu0 %1733
        %1735 = vrot.lane.b32.xlu0 %v1352, 126
        %v1736 = vpop.permute.xlu0 %1735
        %1737 = vrot.lane.b32.xlu0 %v1353, 126
        %v1738 = vpop.permute.xlu0 %1737
        %1739 = vrot.lane.b32.xlu0 %v1354, 126
        %v1740 = vpop.permute.xlu0 %1739
        %v1749 = vrot.slane %v1734, 4
        %v1750 = vsel %vm200, %v1749, %v1726
        %v1751 = vrot.slane %v1726, 4
        %v1752 = vsel %vm200, %v1734, %v1751
        %v1754 = vunpack.c.l.s4 1983009808
        %v1755 = vunpack.c.0.s8 %v1754
        %v1756 = vperm.slane %v1750, %v1755
        %v1758 = vunpack.c.l.s4 1983009808
        %v1759 = vunpack.c.0.s8 %v1758
        %v1760 = vperm.slane %v1752, %v1759
        %v1761 = vrot.slane %v1738, 4
        %v1762 = vsel %vm200, %v1761, %v1730
        %v1763 = vrot.slane %v1730, 4
        %v1764 = vsel %vm200, %v1738, %v1763
        %v1766 = vunpack.c.l.s4 1983009808
        %v1767 = vunpack.c.0.s8 %v1766
        %v1768 = vperm.slane %v1762, %v1767
        %v1770 = vunpack.c.l.s4 1983009808
        %v1771 = vunpack.c.0.s8 %v1770
        %v1772 = vperm.slane %v1764, %v1771
        %v1773 = vrot.slane %v1768, 4
        %v1774 = vsel %vm200, %v1773, %v1756
        %v1775 = vrot.slane %v1756, 4
        %v1776 = vsel %vm200, %v1768, %v1775
        %v1778 = vunpack.c.l.s4 1934713408
        %v1779 = vunpack.c.0.s8 %v1778
        %v1780 = vperm.slane %v1774, %v1779
        %v1782 = vunpack.c.l.s4 1934713408
        %v1783 = vunpack.c.0.s8 %v1782
        %v1784 = vperm.slane %v1776, %v1783
        %v1785 = vrot.slane %v1772, 4
        %v1786 = vsel %vm200, %v1785, %v1760
        %v1787 = vrot.slane %v1760, 4
        %v1788 = vsel %vm200, %v1772, %v1787
        %v1790 = vunpack.c.l.s4 1934713408
        %v1791 = vunpack.c.0.s8 %v1790
        %v1792 = vperm.slane %v1786, %v1791
        %v1794 = vunpack.c.l.s4 1934713408
        %v1795 = vunpack.c.0.s8 %v1794
        %v1796 = vperm.slane %v1788, %v1795
        %v1797 = vrot.slane %v1780, 4
        %v1798 = vsel %vm200, 0.0, %v1797
        %v1799 = vrot.slane %v1784, 4
        %v1800 = vsel %vm200, 0.0, %v1799
        %v1801 = vrot.slane %v1792, 4
        %v1802 = vsel %vm200, 0.0, %v1801
        %v1803 = vrot.slane %v1796, 4
        %v1804 = vsel %vm200, 0.0, %v1803
        %v1805 = vrot.slane %v1736, 4
        %v1806 = vsel %vm200, %v1805, %v1728
        %v1807 = vrot.slane %v1728, 4
        %v1808 = vsel %vm200, %v1736, %v1807
        %v1810 = vunpack.c.l.s4 1983009808
        %v1811 = vunpack.c.0.s8 %v1810
        %v1812 = vperm.slane %v1806, %v1811
        %v1814 = vunpack.c.l.s4 1983009808
        %v1815 = vunpack.c.0.s8 %v1814
        %v1816 = vperm.slane %v1808, %v1815
        %v1817 = vrot.slane %v1740, 4
        %v1818 = vsel %vm200, %v1817, %v1732
        %v1819 = vrot.slane %v1732, 4
        %v1820 = vsel %vm200, %v1740, %v1819
        %v1822 = vunpack.c.l.s4 1983009808
        %v1823 = vunpack.c.0.s8 %v1822
        %v1824 = vperm.slane %v1818, %v1823
        %v1826 = vunpack.c.l.s4 1983009808
        %v1827 = vunpack.c.0.s8 %v1826
        %v1828 = vperm.slane %v1820, %v1827
        %v1829 = vrot.slane %v1824, 4
        %v1830 = vsel %vm200, %v1829, %v1812
        %v1831 = vrot.slane %v1812, 4
        %v1832 = vsel %vm200, %v1824, %v1831
        %v1834 = vunpack.c.l.s4 1934713408
        %v1835 = vunpack.c.0.s8 %v1834
        %v1836 = vperm.slane %v1830, %v1835
        %v1838 = vunpack.c.l.s4 1934713408
        %v1839 = vunpack.c.0.s8 %v1838
        %v1840 = vperm.slane %v1832, %v1839
        %v1841 = vrot.slane %v1828, 4
        %v1842 = vsel %vm200, %v1841, %v1816
        %v1844 = vunpack.c.l.s4 1934713408
        %v1845 = vunpack.c.0.s8 %v1844
        %v1846 = vperm.slane %v1842, %v1845
        %v1847 = vrot.slane %v1836, 4
        %v1848 = vsel %vm200, 0.0, %v1847
        %v1849 = vrot.slane %v1840, 4
        %v1850 = vsel %vm200, 0.0, %v1849
        %v1851 = vrot.slane %v1846, 4
        %v1852 = vsel %vm200, 0.0, %v1851
        %1854 = vrot.lane.b32.xlu0 %v1798, 14
        %v1855 = vpop.permute.xlu0 %1854
        %1858 = vrot.lane.b32.xlu0 %v1784, 28
        %v1859 = vpop.permute.xlu0 %1858
        %1862 = vrot.lane.b32.xlu0 %v1800, 42
        %v1863 = vpop.permute.xlu0 %1862
        %1866 = vrot.lane.b32.xlu0 %v1792, 56
        %v1867 = vpop.permute.xlu0 %1866
        %1870 = vrot.lane.b32.xlu0 %v1802, 70
        %v1871 = vpop.permute.xlu0 %1870
        %1874 = vrot.lane.b32.xlu0 %v1796, 84
        %v1875 = vpop.permute.xlu0 %1874
        %1878 = vrot.lane.b32.xlu0 %v1804, 98
        %v1879 = vpop.permute.xlu0 %1878
        %1882 = vrot.lane.b32.xlu0 %v1836, 112
        %v1883 = vpop.permute.xlu0 %1882
        %1886 = vrot.lane.b32.xlu0 %v1848, 126
        %v1887 = vpop.permute.xlu0 %1886
        %1890 = vrot.lane.b32.xlu0 %v1840, 12
        %v1891 = vpop.permute.xlu0 %1890
        %1894 = vrot.lane.b32.xlu0 %v1850, 26
        %v1895 = vpop.permute.xlu0 %1894
        %1898 = vrot.lane.b32.xlu0 %v1846, 40
        %v1899 = vpop.permute.xlu0 %1898
        %1902 = vrot.lane.b32.xlu0 %v1852, 54
        %v1903 = vpop.permute.xlu0 %1902
        %v1905 = vsel %vm356, %v1780, %v1855
        %v1906 = vsel %vm358, %v1905, %v1859
        %v1907 = vsel %vm360, %v1906, %v1863
        %v1908 = vsel %vm362, %v1907, %v1867
        %v1909 = vsel %vm364, %v1908, %v1871
        %v1910 = vsel %vm366, %v1909, %v1875
        %v1911 = vsel %vm368, %v1910, %v1879
        %v1912 = vsel %vm370, %v1911, %v1883
        %v1913 = vsel %vm372, %v1912, %v1887
        %v1914 = vsel %vm374, %v1887, %v1891
        %v1915 = vsel %vm376, %v1914, %v1895
        %v1916 = vsel %vm378, %v1915, %v1899
        %v1917 = vsel %vm380, %v1916, %v1903
        %v1920 = vrot.slane %v578, 4
        %v1921 = vrot.slane %v582, 4
        %v1926 = vrot.slane %v948, 4
        %v1927 = vrot.slane %v952, 4
        %v1932 = vrot.slane %v1342, 4
        %v1933 = vrot.slane %v1346, 4
        %v1938 = vrot.slane %v1720, 4
        %v1939 = vrot.slane %v1724, 4
        %vm1942 = vcmask 1043456
        %v1943 = vsel %vm1942, %v373, %v1920
        %v1944 = vsel %vm1942, %v381, %v1921
        %v1945 = vsel %vm1942, %v771, %v1926
        %v1946 = vsel %vm1942, %v775, %v1927
        %v1947 = vsel %vm1942, %v1149, %v1932
        %v1948 = vsel %vm1942, %v1153, %v1933
        %v1949 = vsel %vm1942, %v1519, %v1938
        %v1950 = vsel %vm1942, %v1523, %v1939
        %v1951 = vld [vmem:[%s1] sm:$0xff]
        %v1952 = vld [vmem:[%s2] sm:$0xff]
        %1954 = vset.pattern.permute.xlu0 0
        %1955 = vperm.xlu0 %1954, %v1952
        %v1956 = vpop.permute.xlu0 %1955
        %vm1958 = vcmask 293888
        %v1960 = vsel %vm1958, %v1951, 0
        %v1963 = vsel %vm1942, %v1913, 0
        %v1966 = vsel %vm1942, %v1917, 0
        %1968 = vmatpush.msra.mxu0 0.0
        %1969 = vmatpush.msra.mxu0 0.0
        %1970 = vmatpush.msra.mxu0 0.0
        %1971 = vmatpush.msra.mxu0 0.0
        %1972 = vmatpush.msra.mxu0 0.0
        %1973 = vmatpush.msra.mxu0 0.0
        %1974 = vmatpush.msra.mxu0 0.0
        %1975 = vmatpush.msra.mxu0 0.0
        %1976 = vmatpush.msra.mxu0 0.0
        %1977 = vmatpush.msra.mxu0 0.0
        %1978 = vmatpush.msra.mxu0 0.0
        %1979 = vmatpush.msra.mxu0 %v1963
        %1980 = vmatpush.msra.mxu0 %v1949
        %1981 = vmatpush.msra.mxu0 %v1947
        %1982 = vmatpush.msra.mxu0 %v1945
        %1983 = vmatpush.msra.mxu0 %v1943
        %1984 = vmatmul.f32.gmra.mxu0 %v1960
        %v1985 = vpop.f32.mrf.mxu0
        %v1986 = vadd.f32 %v1956, %v1985
        %1987 = vdwg.mxu0
        %1988 = vmatpush.msra.mxu0 0.0
        %1989 = vmatpush.msra.mxu0 0.0
        %1990 = vmatpush.msra.mxu0 0.0
        %1991 = vmatpush.msra.mxu0 0.0
        %1992 = vmatpush.msra.mxu0 0.0
        %1993 = vmatpush.msra.mxu0 0.0
        %1994 = vmatpush.msra.mxu0 0.0
        %1995 = vmatpush.msra.mxu0 0.0
        %1996 = vmatpush.msra.mxu0 0.0
        %1997 = vmatpush.msra.mxu0 0.0
        %1998 = vmatpush.msra.mxu0 0.0
        %1999 = vmatpush.msra.mxu0 %v1966
        %2000 = vmatpush.msra.mxu0 %v1950
        %2001 = vmatpush.msra.mxu0 %v1948
        %2002 = vmatpush.msra.mxu0 %v1946
        %2003 = vmatpush.msra.mxu0 %v1944
        %2004 = vmatmul.f32.gmra.mxu0 %v1960
        %v2005 = vpop.f32.mrf.mxu0
        %v2006 = vadd.f32 %v1956, %v2005
        %2007 = vdwg.mxu0
        %vm2008 = vcmask 556032
        %v2009 = vsel %vm2008, %v2006, 0.0
        %v2010 = vadd.f32 %v1986, %v2009
        %2011 = vadd.xlane.f32.xlu0 %v2010
        %v2012 = vpop.xlane.xlu0 %2011
        %v2013 = vmul.f32 %v2012, 0.0051020407
        %v2014 = vsub.f32 %v1986, %v2013
        %v2015 = vsub.f32 %v2006, %v2013
        %v2016 = vmul.f32 %v2014, %v2014
        %v2017 = vmul.f32 %v2015, %v2015
        %v2018 = vsel %vm2008, %v2017, 0.0
        %v2019 = vadd.f32 %v2016, %v2018
        %2020 = vadd.xlane.f32.xlu0 %v2019
        %v2021 = vpop.xlane.xlu0 %2020
        %v2022 = vmul.f32 %v2021, 0.0051020407
        %v2023 = vadd.f32 %v2022, 1e-05
        %v2024 = vrsqrt.pop %v2023
        %v2025 = vmul.f32 %v2024, %v2023
        %v2026 = vmul.f32 %v2025, %v2024
        %v2027 = vmul.f32 0.5, %v2026
        %v2028 = vsub.f32 1.5, %v2027
        %v2029 = vmul.f32 %v2024, %v2028
        %vm2030 = vweird.f32 %v2023
        %vm2031 = vweird.f32 %v2024
        %vm2032 = vmor %vm2030, %vm2031
        %v2033 = vsel %vm2032, %v2024, %v2029
        %v2034 = vmul.f32 %v2014, %v2033
        %v2035 = vmul.f32 %v2015, %v2033
        %2036 = vst [vmem:[%s190] sm:$0xff] %v2034
        %2037 = vst.msk [vmem:[%s190 + $0x8] sm:$0xff] %vm2008, %v2035
        %s2038 = sand.u32 %s96, 1
        %s2039 = scalar_lea.sflag [#allocation4], %s2038
        %s2040 = sand.u32 %s96, 1
        %s2041 = smul.addr %s2040, 16
        %s2042 = scalar_lea.vmem [#allocation5], %s2041
        // Predicated region
        $region37: #{tpu_custom_call.1} parent=31 // pred_check
          %p2043 = pneg %p106
        $region38: #{tpu_custom_call.1} parent=31 // pred_check_branch
          %2045 = sbr.rel (%p2043) target = $region40
        $region39: #{tpu_custom_call.1} parent=31 // pred_region
          %2047 = vsyncadd %s2039, 0
          %s2048 = smul.addr %s20, 2
          %s2049 = smul.addr %s2048, 8
          %s2050 = scalar_lea.hbm %s3, %s2049
          %s2052 = sshll.u32 %s2042, 4
          %s2053 = int_to_ptr.vmem [resolvable:$true] %s2052
          %s2054 = sshll.u32 %s2050, 4
          %s2055 = int_to_ptr.hbm [resolvable:$true] %s2054
          %2057 = dma.vmem_to_hbm [thread:$0]  %s2053, 256, %s2055, %s2039
        $region40: #{tpu_custom_call.1} parent=31 // pred_fallthru
          _
      $region32: #{tpu_custom_call.1} parent=5 // pred_fallthru
        _
      %p2058 = scmp.le.s32.totalorder 2, %s15
      // Predicated region
      $region41: #{tpu_custom_call.1} parent=5 // pred_check
        %p2059 = pneg %p2058
      $region42: #{tpu_custom_call.1} parent=5 // pred_check_branch
        %2061 = sbr.rel (%p2059) target = $region44
      $region43: #{tpu_custom_call.1} parent=5 // pred_region
        %s2062 = ssub.s32 %s15, 2
        // Predicated region
        $region45: #{tpu_custom_call.1} parent=43 // pred_check
          %p2063 = pneg %p112
        $region46: #{tpu_custom_call.1} parent=43 // pred_check_branch
          %2065 = sbr.rel (%p2063) target = $region48
        $region47: #{tpu_custom_call.1} parent=43 // pred_region
          %s2066 = sand.u32 %s97, 1
          %s2067 = scalar_lea.sflag [#allocation4], %s2066
          %s2068 = sand.u32 %s97, 1
          %s2069 = smul.addr %s2068, 16
          %s2070 = scalar_lea.vmem [#allocation5], %s2069
          %2072 = dma.done %s2067, 256
        $region48: #{tpu_custom_call.1} parent=43 // pred_fallthru
          _
      $region44: #{tpu_custom_call.1} parent=5 // pred_fallthru
        _
    $region6: #{tpu_custom_call.1} parent=1 // loop_footer
      %s19 = sadd.s32 1, %s15
    $region7: #{tpu_custom_call.1} parent=1 // loop_footer_branch
      %14 = sbr.rel target = $region3
    $region8: #{tpu_custom_call.1} parent=1 // loop_exit
      _
    %2073 = vsyncpa [#allocation3], 1
    %s2074 = scalar_lea.sflag [#allocation3], 1
    %2075 = vsyncpa %s2074, 1
    %2076 = vsyncpa [#allocation4], 1
    %s2077 = scalar_lea.sflag [#allocation4], 1
    %2078 = vsyncpa %s2077, 1

</llo_original>
